<compile_context>
chip_gen: v5e
topology: v5e:2x2
jax: 0.10.0
libtpu: 0.0.40
codegen_flags: <defaults>
</compile_context>

<pallas_src>
import functools

import jax
import jax.numpy as jnp
from jax.experimental import pallas as pl
from jax.experimental.pallas import tpu as pltpu

LRELU_SLOPE = 0.2
BN_EPS = 1e-5
KSIZE = 4
PAD = 1
TM_MAX = 256  # M-tile (rows of the im2col patch matrix) when the grid is used


# ----------------------------------------------------------------------------
# Pallas kernel: fused (im2col-matmul + folded scale/shift + leaky)
# ----------------------------------------------------------------------------
def _fused_conv_kernel(apply_leaky, p_ref, w_ref, s_ref, t_ref, o_ref):
    # p_ref: (TM, K) bf16 im2col patches     w_ref: (K, N) bf16 weights
    # s_ref/t_ref: (1, N) f32   eff_scale = scale*mask
    #                            eff_shift = (bias*scale + shift)*mask
    y = jnp.dot(p_ref[...], w_ref[...], preferred_element_type=jnp.float32)
    y = y * s_ref[...] + t_ref[...]
    if apply_leaky:
        # mask is binary {0,1}; mask-then-leaky == leaky-then-mask (leaky(0)=0),
        # so this ordering reproduces both layer-1 and middle-layer orders.
        y = jnp.where(y >= 0.0, y, LRELU_SLOPE * y)
    o_ref[...] = y.astype(o_ref.dtype)


def _round_up(x, m):
    return ((x + m - 1) // m) * m


def _fused_conv(patches, w2d, eff_scale, eff_shift, apply_leaky, out_dtype):
    """patches (M,K)@w2d (K,N) with fused per-channel post-ops, via Pallas."""
    M, K = patches.shape
    _, N = w2d.shape

    if M > TM_MAX:
        tm = TM_MAX
        Mp = _round_up(M, tm)
        if Mp != M:
            patches = jnp.pad(patches, ((0, Mp - M), (0, 0)))
    else:
        tm = M
        Mp = M
    grid = (Mp // tm,)

    cost = pl.CostEstimate(
        flops=2 * Mp * K * N,
        transcendentals=0,
        bytes_accessed=(Mp * K * patches.dtype.itemsize
                        + K * N * w2d.dtype.itemsize
                        + 2 * N * 4
                        + Mp * N * jnp.dtype(out_dtype).itemsize))

    kernel = functools.partial(_fused_conv_kernel, apply_leaky)
    out = pl.pallas_call(
        kernel,
        out_shape=jax.ShapeDtypeStruct((Mp, N), out_dtype),
        grid=grid,
        in_specs=[
            pl.BlockSpec((tm, K), lambda i: (i, 0)),
            pl.BlockSpec((K, N), lambda i: (0, 0)),
            pl.BlockSpec((1, N), lambda i: (0, 0)),
            pl.BlockSpec((1, N), lambda i: (0, 0)),
        ],
        out_specs=pl.BlockSpec((tm, N), lambda i: (i, 0)),
        compiler_params=pltpu.CompilerParams(
            dimension_semantics=("parallel",)),
        cost_estimate=cost,
    )(patches, w2d, eff_scale, eff_shift)
    return out[:M] if Mp != M else out


# ----------------------------------------------------------------------------
# Glue: im2col patch extraction (reshape/slice only, runs in bf16)
# ----------------------------------------------------------------------------
def _im2col(x_nhwc, ksize, stride, pad):
    N, H, W, C = x_nhwc.shape
    xp = jnp.pad(x_nhwc, ((0, 0), (pad, pad), (pad, pad), (0, 0)))
    OH = (H + 2 * pad - ksize) // stride + 1
    OW = (W + 2 * pad - ksize) // stride + 1
    cols = []
    for kh in range(ksize):
        for kw in range(ksize):
            sl = xp[:, kh:kh + stride * (OH - 1) + 1:stride,
                    kw:kw + stride * (OW - 1) + 1:stride, :]
            cols.append(sl)
    # (N, OH, OW, KH*KW, C) -> (N*OH*OW, KH*KW*C)  ordering (kh, kw, cin)
    patches = jnp.stack(cols, axis=3).reshape(N * OH * OW, ksize * ksize * C)
    return patches, OH, OW


# ----------------------------------------------------------------------------
# Parameter setup (deterministic, synthetic) — mirrors the PyTorch __init__.
# All per-forward weight prep (reshape, bf16 cast, bias/BN/mask folding) is
# hoisted here.
# ----------------------------------------------------------------------------
def init_params(key, input_nc=3, ndf=8, n_layers=3, threshold=0.5):
    # norm_layer = BatchNorm2d  =>  use_bias = False for middle convs
    cfgs = []
    # (cin, cout, stride, has_bias, has_bn, has_mask, has_leaky)
    cfgs.append((input_nc, ndf, 2, True, False, True, True))
    nf_mult = 1
    for n in range(1, n_layers):
        nf_prev, nf_mult = nf_mult, min(2 ** n, 8)
        cfgs.append((ndf * nf_prev, ndf * nf_mult, 2, False, True, True, True))
    nf_prev, nf_mult = nf_mult, min(2 ** n_layers, 8)
    cfgs.append((ndf * nf_prev, ndf * nf_mult, 1, False, True, True, True))
    cfgs.append((ndf * nf_mult, 1, 1, True, False, False, False))

    params = []
    for (cin, cout, stride, has_bias, has_bn, has_mask, has_leaky) in cfgs:
        key, k1, k2, k3, k4, k5, k6, k7 = jax.random.split(key, 8)
        w = jax.random.normal(k1, (KSIZE, KSIZE, cin, cout), jnp.float32) * 0.05
        bias = (jax.random.normal(k2, (cout,), jnp.float32) * 0.05
                if has_bias else jnp.zeros((cout,), jnp.float32))
        if has_bn:
            gamma = 1.0 + 0.1 * jax.random.normal(k3, (cout,), jnp.float32)
            beta = 0.1 * jax.random.normal(k4, (cout,), jnp.float32)
            rmean = 0.1 * jax.random.normal(k5, (cout,), jnp.float32)
            rvar = jnp.abs(1.0 + 0.1 * jax.random.normal(k6, (cout,), jnp.float32))
            scale = gamma / jnp.sqrt(rvar + BN_EPS)
            shift = beta - rmean * scale
        else:
            scale = jnp.ones((cout,), jnp.float32)
            shift = jnp.zeros((cout,), jnp.float32)
        if has_mask:
            alpha = jax.random.normal(k7, (cout,), jnp.float32)
            mask = (jax.nn.sigmoid(alpha) > threshold).astype(jnp.float32)
        else:
            mask = jnp.ones((cout,), jnp.float32)

        # --- precomputed (hoisted) kernel-side parameters ---
        w2d = w.reshape(-1, cout).astype(jnp.bfloat16)          # (K, N) bf16
        eff_scale = (scale * mask)[None, :]                      # (1, N) f32
        eff_shift = ((bias * scale + shift) * mask)[None, :]     # (1, N) f32

        params.append(dict(w=w, bias=bias, scale=scale, shift=shift, mask=mask,
                           w2d=w2d, eff_scale=eff_scale, eff_shift=eff_shift,
                           stride=stride, leaky=has_leaky))
    return params


# ----------------------------------------------------------------------------
# Forward pass (Pallas) and references
# ----------------------------------------------------------------------------
def mask_nlayer_discriminator(x_nchw, params):
    x = jnp.transpose(x_nchw, (0, 2, 3, 1)).astype(jnp.bfloat16)  # NCHW -> NHWC
    n_total = len(params)
    for li, p in enumerate(params):
        patches, OH, OW = _im2col(x, KSIZE, p["stride"], PAD)
        out_dtype = jnp.float32 if li == n_total - 1 else jnp.bfloat16
        y = _fused_conv(patches, p["w2d"], p["eff_scale"], p["eff_shift"],
                        p["leaky"], out_dtype)
        cout = p["w2d"].shape[-1]
        x = y.reshape(x.shape[0], OH, OW, cout)
    return jnp.transpose(x, (0, 3, 1, 2))  # NHWC -> NCHW


def reference_bf16(x_nchw, params):
    """Plain-JAX reference mirroring the kernel's numerics (bf16 MXU inputs,
    f32 accumulate + post-ops, bf16 inter-layer activations)."""
    x = jnp.transpose(x_nchw, (0, 2, 3, 1)).astype(jnp.bfloat16)
    n_total = len(params)
    for li, p in enumerate(params):
        patches, OH, OW = _im2col(x, KSIZE, p["stride"], PAD)
        y = jnp.dot(patches, p["w2d"], preferred_element_type=jnp.float32)
        y = y * p["eff_scale"] + p["eff_shift"]
        if p["leaky"]:
            y = jnp.where(y >= 0.0, y, LRELU_SLOPE * y)
        out_dtype = jnp.float32 if li == n_total - 1 else jnp.bfloat16
        x = y.astype(out_dtype).reshape(x.shape[0], OH, OW, p["w2d"].shape[-1])
    return jnp.transpose(x, (0, 3, 1, 2))


def reference_f32(x_nchw, params):
    """Full-precision reference of the original module semantics."""
    x = jnp.transpose(x_nchw, (0, 2, 3, 1)).astype(jnp.float32)
    for p in params:
        y = jax.lax.conv_general_dilated(
            x, p["w"], (p["stride"], p["stride"]), ((PAD, PAD), (PAD, PAD)),
            dimension_numbers=("NHWC", "HWIO", "NHWC"))
        y = y + p["bias"]
        y = y * p["scale"] + p["shift"]
        y = y * p["mask"]
        if p["leaky"]:
            y = jnp.where(y >= 0.0, y, LRELU_SLOPE * y)
        x = y
    return jnp.transpose(x, (0, 3, 1, 2))


if __name__ == "__main__":
    key = jax.random.PRNGKey(0)
    kx, kp = jax.random.split(key)
    # Small shapes: batch=2, input_nc=3, spatial=32, ndf=8, n_layers=3
    x = jax.random.normal(kx, (2, 3, 32, 32), jnp.float32)
    params = init_params(kp, input_nc=3, ndf=8, n_layers=3, threshold=0.5)

    fwd = jax.jit(lambda xx: mask_nlayer_discriminator(xx, params))
    out = jax.block_until_ready(fwd(x))

    ref_b = jax.block_until_ready(reference_bf16(x, params))
    ref_f = jax.block_until_ready(reference_f32(x, params))

    assert out.shape == ref_f.shape, (out.shape, ref_f.shape)
    # Tight check against the bf16-matched reference (same quantization points).
    assert jnp.allclose(out, ref_b, atol=2e-2, rtol=2e-2), float(
        jnp.max(jnp.abs(out - ref_b)))
    # Loose fidelity check against the full-f32 module semantics.
    assert jnp.allclose(out, ref_f, atol=1e-1, rtol=1e-1), float(
        jnp.max(jnp.abs(out - ref_f)))
    print("KERNEL_OK")
</pallas_src>

<mosaic_0001>
module attributes {stable_mosaic.version = 11 : i64} {
  func.func @_fused_conv_kernel(%arg0: i32, %arg1: memref<256x48xbf16, #tpu.memory_space<vmem>>, %arg2: memref<48x8xbf16, #tpu.memory_space<vmem>>, %arg3: memref<1x8xf32, #tpu.memory_space<vmem>>, %arg4: memref<1x8xf32, #tpu.memory_space<vmem>>, %arg5: memref<256x8xbf16, #tpu.memory_space<vmem>>) attributes {dimension_semantics = [#tpu.dimension_semantics<parallel>], iteration_bounds = array<i64: 2>, scalar_prefetch = 0 : i64, scratch_operands = 0 : i64, tpu.core_type = #tpu.core_type<tc>, window_params = [{transform_indices = @transform_0, window_bounds = array<i64: 256, 48>}, {pipeline_mode = #tpu.pipeline_mode<synchronous>, transform_indices = @transform_1, window_bounds = array<i64: 48, 8>}, {pipeline_mode = #tpu.pipeline_mode<synchronous>, transform_indices = @transform_2, window_bounds = array<i64: 1, 8>}, {pipeline_mode = #tpu.pipeline_mode<synchronous>, transform_indices = @transform_3, window_bounds = array<i64: 1, 8>}, {transform_indices = @transform_4, window_bounds = array<i64: 256, 8>}]} {
    %c0 = arith.constant 0 : index
    %c0_0 = arith.constant 0 : index
    %0 = vector.load %arg1[%c0, %c0_0] : memref<256x48xbf16, #tpu.memory_space<vmem>>, vector<256x48xbf16>
    %c0_1 = arith.constant 0 : index
    %c0_2 = arith.constant 0 : index
    %1 = vector.load %arg2[%c0_1, %c0_2] : memref<48x8xbf16, #tpu.memory_space<vmem>>, vector<48x8xbf16>
    %cst = arith.constant dense<0.000000e+00> : vector<256x8xf32>
    %2 = tpu.matmul %0, %1, %cst {dimension_numbers = #tpu.dot_dimension_numbers<[1], [0], [0], [1], [0, 0, 1, 1], [], []>} : vector<256x48xbf16>, vector<48x8xbf16>, vector<256x8xf32> -> vector<256x8xf32>
    %c0_3 = arith.constant 0 : index
    %c0_4 = arith.constant 0 : index
    %3 = vector.load %arg3[%c0_3, %c0_4] : memref<1x8xf32, #tpu.memory_space<vmem>>, vector<1x8xf32>
    %4 = vector.broadcast %3 : vector<1x8xf32> to vector<256x8xf32>
    %5 = arith.mulf %2, %4 : vector<256x8xf32>
    %c0_5 = arith.constant 0 : index
    %c0_6 = arith.constant 0 : index
    %6 = vector.load %arg4[%c0_5, %c0_6] : memref<1x8xf32, #tpu.memory_space<vmem>>, vector<1x8xf32>
    %7 = vector.broadcast %6 : vector<1x8xf32> to vector<256x8xf32>
    %8 = arith.addf %5, %7 : vector<256x8xf32>
    %cst_7 = arith.constant 0.000000e+00 : f32
    %9 = vector.broadcast %cst_7 : f32 to vector<256x8xf32>
    %10 = arith.cmpf oge, %8, %9 : vector<256x8xf32>
    %cst_8 = arith.constant 2.000000e-01 : f32
    %11 = vector.broadcast %cst_8 : f32 to vector<256x8xf32>
    %12 = arith.mulf %11, %8 : vector<256x8xf32>
    %13 = arith.select %10, %8, %12 : vector<256x8xi1>, vector<256x8xf32>
    %14 = arith.truncf %13 : vector<256x8xf32> to vector<256x8xbf16>
    %c0_9 = arith.constant 0 : index
    %c0_10 = arith.constant 0 : index
    %15 = vector.load %arg5[%c0_9, %c0_10] : memref<256x8xbf16, #tpu.memory_space<vmem>>, vector<256x8xbf16>
    tpu.vector_store %arg5[%c0_9, %c0_10], %14 {strides = array<i32>} : memref<256x8xbf16, #tpu.memory_space<vmem>>, vector<256x8xbf16>,
    return
  }
  func.func @transform_0(%arg0: i32) -> (i32, i32) {
    %c0_i32 = arith.constant 0 : i32
    %c0_i32_0 = arith.constant 0 : i32
    return %arg0, %c0_i32 : i32, i32
  }
  func.func @transform_1(%arg0: i32) -> (i32, i32) {
    %c0_i32 = arith.constant 0 : i32
    %c0_i32_0 = arith.constant 0 : i32
    %c0_i32_1 = arith.constant 0 : i32
    return %c0_i32, %c0_i32_0 : i32, i32
  }
  func.func @transform_2(%arg0: i32) -> (i32, i32) {
    %c0_i32 = arith.constant 0 : i32
    %c0_i32_0 = arith.constant 0 : i32
    %c0_i32_1 = arith.constant 0 : i32
    return %c0_i32, %c0_i32_0 : i32, i32
  }
  func.func @transform_3(%arg0: i32) -> (i32, i32) {
    %c0_i32 = arith.constant 0 : i32
    %c0_i32_0 = arith.constant 0 : i32
    %c0_i32_1 = arith.constant 0 : i32
    return %c0_i32, %c0_i32_0 : i32, i32
  }
  func.func @transform_4(%arg0: i32) -> (i32, i32) {
    %c0_i32 = arith.constant 0 : i32
    %c0_i32_0 = arith.constant 0 : i32
    return %arg0, %c0_i32 : i32, i32
  }
}

module attributes {stable_mosaic.version = 11 : i64} {
  func.func @_fused_conv_kernel(%arg0: i32, %arg1: memref<128x128xbf16, #tpu.memory_space<vmem>>, %arg2: memref<128x16xbf16, #tpu.memory_space<vmem>>, %arg3: memref<1x16xf32, #tpu.memory_space<vmem>>, %arg4: memref<1x16xf32, #tpu.memory_space<vmem>>, %arg5: memref<128x16xbf16, #tpu.memory_space<vmem>>) attributes {dimension_semantics = [#tpu.dimension_semantics<parallel>], iteration_bounds = array<i64: 1>, scalar_prefetch = 0 : i64, scratch_operands = 0 : i64, tpu.core_type = #tpu.core_type<tc>, window_params = [{transform_indices = @transform_0, window_bounds = array<i64: 128, 128>}, {pipeline_mode = #tpu.pipeline_mode<synchronous>, transform_indices = @transform_1, window_bounds = array<i64: 128, 16>}, {pipeline_mode = #tpu.pipeline_mode<synchronous>, transform_indices = @transform_2, window_bounds = array<i64: 1, 16>}, {pipeline_mode = #tpu.pipeline_mode<synchronous>, transform_indices = @transform_3, window_bounds = array<i64: 1, 16>}, {transform_indices = @transform_4, window_bounds = array<i64: 128, 16>}]} {
    %c0 = arith.constant 0 : index
    %c0_0 = arith.constant 0 : index
    %0 = vector.load %arg1[%c0, %c0_0] : memref<128x128xbf16, #tpu.memory_space<vmem>>, vector<128x128xbf16>
    %c0_1 = arith.constant 0 : index
    %c0_2 = arith.constant 0 : index
    %1 = vector.load %arg2[%c0_1, %c0_2] : memref<128x16xbf16, #tpu.memory_space<vmem>>, vector<128x16xbf16>
    %cst = arith.constant dense<0.000000e+00> : vector<128x16xf32>
    %2 = tpu.matmul %0, %1, %cst {dimension_numbers = #tpu.dot_dimension_numbers<[1], [0], [0], [1], [0, 0, 1, 1], [], []>} : vector<128x128xbf16>, vector<128x16xbf16>, vector<128x16xf32> -> vector<128x16xf32>
    %c0_3 = arith.constant 0 : index
    %c0_4 = arith.constant 0 : index
    %3 = vector.load %arg3[%c0_3, %c0_4] : memref<1x16xf32, #tpu.memory_space<vmem>>, vector<1x16xf32>
    %4 = vector.broadcast %3 : vector<1x16xf32> to vector<128x16xf32>
    %5 = arith.mulf %2, %4 : vector<128x16xf32>
    %c0_5 = arith.constant 0 : index
    %c0_6 = arith.constant 0 : index
    %6 = vector.load %arg4[%c0_5, %c0_6] : memref<1x16xf32, #tpu.memory_space<vmem>>, vector<1x16xf32>
    %7 = vector.broadcast %6 : vector<1x16xf32> to vector<128x16xf32>
    %8 = arith.addf %5, %7 : vector<128x16xf32>
    %cst_7 = arith.constant 0.000000e+00 : f32
    %9 = vector.broadcast %cst_7 : f32 to vector<128x16xf32>
    %10 = arith.cmpf oge, %8, %9 : vector<128x16xf32>
    %cst_8 = arith.constant 2.000000e-01 : f32
    %11 = vector.broadcast %cst_8 : f32 to vector<128x16xf32>
    %12 = arith.mulf %11, %8 : vector<128x16xf32>
    %13 = arith.select %10, %8, %12 : vector<128x16xi1>, vector<128x16xf32>
    %14 = arith.truncf %13 : vector<128x16xf32> to vector<128x16xbf16>
    %c0_9 = arith.constant 0 : index
    %c0_10 = arith.constant 0 : index
    %15 = vector.load %arg5[%c0_9, %c0_10] : memref<128x16xbf16, #tpu.memory_space<vmem>>, vector<128x16xbf16>
    tpu.vector_store %arg5[%c0_9, %c0_10], %14 {strides = array<i32>} : memref<128x16xbf16, #tpu.memory_space<vmem>>, vector<128x16xbf16>,
    return
  }
  func.func @transform_0(%arg0: i32) -> (i32, i32) {
    %c0_i32 = arith.constant 0 : i32
    %c0_i32_0 = arith.constant 0 : i32
    return %arg0, %c0_i32 : i32, i32
  }
  func.func @transform_1(%arg0: i32) -> (i32, i32) {
    %c0_i32 = arith.constant 0 : i32
    %c0_i32_0 = arith.constant 0 : i32
    %c0_i32_1 = arith.constant 0 : i32
    return %c0_i32, %c0_i32_0 : i32, i32
  }
  func.func @transform_2(%arg0: i32) -> (i32, i32) {
    %c0_i32 = arith.constant 0 : i32
    %c0_i32_0 = arith.constant 0 : i32
    %c0_i32_1 = arith.constant 0 : i32
    return %c0_i32, %c0_i32_0 : i32, i32
  }
  func.func @transform_3(%arg0: i32) -> (i32, i32) {
    %c0_i32 = arith.constant 0 : i32
    %c0_i32_0 = arith.constant 0 : i32
    %c0_i32_1 = arith.constant 0 : i32
    return %c0_i32, %c0_i32_0 : i32, i32
  }
  func.func @transform_4(%arg0: i32) -> (i32, i32) {
    %c0_i32 = arith.constant 0 : i32
    %c0_i32_0 = arith.constant 0 : i32
    return %arg0, %c0_i32 : i32, i32
  }
}

module attributes {stable_mosaic.version = 11 : i64} {
  func.func @_fused_conv_kernel(%arg0: i32, %arg1: memref<32x256xbf16, #tpu.memory_space<vmem>>, %arg2: memref<256x32xbf16, #tpu.memory_space<vmem>>, %arg3: memref<1x32xf32, #tpu.memory_space<vmem>>, %arg4: memref<1x32xf32, #tpu.memory_space<vmem>>, %arg5: memref<32x32xbf16, #tpu.memory_space<vmem>>) attributes {dimension_semantics = [#tpu.dimension_semantics<parallel>], iteration_bounds = array<i64: 1>, scalar_prefetch = 0 : i64, scratch_operands = 0 : i64, tpu.core_type = #tpu.core_type<tc>, window_params = [{transform_indices = @transform_0, window_bounds = array<i64: 32, 256>}, {pipeline_mode = #tpu.pipeline_mode<synchronous>, transform_indices = @transform_1, window_bounds = array<i64: 256, 32>}, {pipeline_mode = #tpu.pipeline_mode<synchronous>, transform_indices = @transform_2, window_bounds = array<i64: 1, 32>}, {pipeline_mode = #tpu.pipeline_mode<synchronous>, transform_indices = @transform_3, window_bounds = array<i64: 1, 32>}, {transform_indices = @transform_4, window_bounds = array<i64: 32, 32>}]} {
    %c0 = arith.constant 0 : index
    %c0_0 = arith.constant 0 : index
    %0 = vector.load %arg1[%c0, %c0_0] : memref<32x256xbf16, #tpu.memory_space<vmem>>, vector<32x256xbf16>
    %c0_1 = arith.constant 0 : index
    %c0_2 = arith.constant 0 : index
    %1 = vector.load %arg2[%c0_1, %c0_2] : memref<256x32xbf16, #tpu.memory_space<vmem>>, vector<256x32xbf16>
    %cst = arith.constant dense<0.000000e+00> : vector<32x32xf32>
    %2 = tpu.matmul %0, %1, %cst {dimension_numbers = #tpu.dot_dimension_numbers<[1], [0], [0], [1], [0, 0, 1, 1], [], []>} : vector<32x256xbf16>, vector<256x32xbf16>, vector<32x32xf32> -> vector<32x32xf32>
    %c0_3 = arith.constant 0 : index
    %c0_4 = arith.constant 0 : index
    %3 = vector.load %arg3[%c0_3, %c0_4] : memref<1x32xf32, #tpu.memory_space<vmem>>, vector<1x32xf32>
    %4 = vector.broadcast %3 : vector<1x32xf32> to vector<32x32xf32>
    %5 = arith.mulf %2, %4 : vector<32x32xf32>
    %c0_5 = arith.constant 0 : index
    %c0_6 = arith.constant 0 : index
    %6 = vector.load %arg4[%c0_5, %c0_6] : memref<1x32xf32, #tpu.memory_space<vmem>>, vector<1x32xf32>
    %7 = vector.broadcast %6 : vector<1x32xf32> to vector<32x32xf32>
    %8 = arith.addf %5, %7 : vector<32x32xf32>
    %cst_7 = arith.constant 0.000000e+00 : f32
    %9 = vector.broadcast %cst_7 : f32 to vector<32x32xf32>
    %10 = arith.cmpf oge, %8, %9 : vector<32x32xf32>
    %cst_8 = arith.constant 2.000000e-01 : f32
    %11 = vector.broadcast %cst_8 : f32 to vector<32x32xf32>
    %12 = arith.mulf %11, %8 : vector<32x32xf32>
    %13 = arith.select %10, %8, %12 : vector<32x32xi1>, vector<32x32xf32>
    %14 = arith.truncf %13 : vector<32x32xf32> to vector<32x32xbf16>
    %c0_9 = arith.constant 0 : index
    %c0_10 = arith.constant 0 : index
    %15 = vector.load %arg5[%c0_9, %c0_10] : memref<32x32xbf16, #tpu.memory_space<vmem>>, vector<32x32xbf16>
    tpu.vector_store %arg5[%c0_9, %c0_10], %14 {strides = array<i32>} : memref<32x32xbf16, #tpu.memory_space<vmem>>, vector<32x32xbf16>,
    return
  }
  func.func @transform_0(%arg0: i32) -> (i32, i32) {
    %c0_i32 = arith.constant 0 : i32
    %c0_i32_0 = arith.constant 0 : i32
    return %arg0, %c0_i32 : i32, i32
  }
  func.func @transform_1(%arg0: i32) -> (i32, i32) {
    %c0_i32 = arith.constant 0 : i32
    %c0_i32_0 = arith.constant 0 : i32
    %c0_i32_1 = arith.constant 0 : i32
    return %c0_i32, %c0_i32_0 : i32, i32
  }
  func.func @transform_2(%arg0: i32) -> (i32, i32) {
    %c0_i32 = arith.constant 0 : i32
    %c0_i32_0 = arith.constant 0 : i32
    %c0_i32_1 = arith.constant 0 : i32
    return %c0_i32, %c0_i32_0 : i32, i32
  }
  func.func @transform_3(%arg0: i32) -> (i32, i32) {
    %c0_i32 = arith.constant 0 : i32
    %c0_i32_0 = arith.constant 0 : i32
    %c0_i32_1 = arith.constant 0 : i32
    return %c0_i32, %c0_i32_0 : i32, i32
  }
  func.func @transform_4(%arg0: i32) -> (i32, i32) {
    %c0_i32 = arith.constant 0 : i32
    %c0_i32_0 = arith.constant 0 : i32
    return %arg0, %c0_i32 : i32, i32
  }
}

module attributes {stable_mosaic.version = 11 : i64} {
  func.func @_fused_conv_kernel(%arg0: i32, %arg1: memref<18x512xbf16, #tpu.memory_space<vmem>>, %arg2: memref<512x64xbf16, #tpu.memory_space<vmem>>, %arg3: memref<1x64xf32, #tpu.memory_space<vmem>>, %arg4: memref<1x64xf32, #tpu.memory_space<vmem>>, %arg5: memref<18x64xbf16, #tpu.memory_space<vmem>>) attributes {dimension_semantics = [#tpu.dimension_semantics<parallel>], iteration_bounds = array<i64: 1>, scalar_prefetch = 0 : i64, scratch_operands = 0 : i64, tpu.core_type = #tpu.core_type<tc>, window_params = [{transform_indices = @transform_0, window_bounds = array<i64: 18, 512>}, {pipeline_mode = #tpu.pipeline_mode<synchronous>, transform_indices = @transform_1, window_bounds = array<i64: 512, 64>}, {pipeline_mode = #tpu.pipeline_mode<synchronous>, transform_indices = @transform_2, window_bounds = array<i64: 1, 64>}, {pipeline_mode = #tpu.pipeline_mode<synchronous>, transform_indices = @transform_3, window_bounds = array<i64: 1, 64>}, {transform_indices = @transform_4, window_bounds = array<i64: 18, 64>}]} {
    %c0 = arith.constant 0 : index
    %c0_0 = arith.constant 0 : index
    %0 = vector.load %arg1[%c0, %c0_0] : memref<18x512xbf16, #tpu.memory_space<vmem>>, vector<18x512xbf16>
    %c0_1 = arith.constant 0 : index
    %c0_2 = arith.constant 0 : index
    %1 = vector.load %arg2[%c0_1, %c0_2] : memref<512x64xbf16, #tpu.memory_space<vmem>>, vector<512x64xbf16>
    %cst = arith.constant dense<0.000000e+00> : vector<18x64xf32>
    %2 = tpu.matmul %0, %1, %cst {dimension_numbers = #tpu.dot_dimension_numbers<[1], [0], [0], [1], [0, 0, 1, 1], [], []>} : vector<18x512xbf16>, vector<512x64xbf16>, vector<18x64xf32> -> vector<18x64xf32>
    %c0_3 = arith.constant 0 : index
    %c0_4 = arith.constant 0 : index
    %3 = vector.load %arg3[%c0_3, %c0_4] : memref<1x64xf32, #tpu.memory_space<vmem>>, vector<1x64xf32>
    %4 = vector.broadcast %3 : vector<1x64xf32> to vector<18x64xf32>
    %5 = arith.mulf %2, %4 : vector<18x64xf32>
    %c0_5 = arith.constant 0 : index
    %c0_6 = arith.constant 0 : index
    %6 = vector.load %arg4[%c0_5, %c0_6] : memref<1x64xf32, #tpu.memory_space<vmem>>, vector<1x64xf32>
    %7 = vector.broadcast %6 : vector<1x64xf32> to vector<18x64xf32>
    %8 = arith.addf %5, %7 : vector<18x64xf32>
    %cst_7 = arith.constant 0.000000e+00 : f32
    %9 = vector.broadcast %cst_7 : f32 to vector<18x64xf32>
    %10 = arith.cmpf oge, %8, %9 : vector<18x64xf32>
    %cst_8 = arith.constant 2.000000e-01 : f32
    %11 = vector.broadcast %cst_8 : f32 to vector<18x64xf32>
    %12 = arith.mulf %11, %8 : vector<18x64xf32>
    %13 = arith.select %10, %8, %12 : vector<18x64xi1>, vector<18x64xf32>
    %14 = arith.truncf %13 : vector<18x64xf32> to vector<18x64xbf16>
    %c0_9 = arith.constant 0 : index
    %c0_10 = arith.constant 0 : index
    %15 = vector.load %arg5[%c0_9, %c0_10] : memref<18x64xbf16, #tpu.memory_space<vmem>>, vector<18x64xbf16>
    tpu.vector_store %arg5[%c0_9, %c0_10], %14 {strides = array<i32>} : memref<18x64xbf16, #tpu.memory_space<vmem>>, vector<18x64xbf16>,
    return
  }
  func.func @transform_0(%arg0: i32) -> (i32, i32) {
    %c0_i32 = arith.constant 0 : i32
    %c0_i32_0 = arith.constant 0 : i32
    return %arg0, %c0_i32 : i32, i32
  }
  func.func @transform_1(%arg0: i32) -> (i32, i32) {
    %c0_i32 = arith.constant 0 : i32
    %c0_i32_0 = arith.constant 0 : i32
    %c0_i32_1 = arith.constant 0 : i32
    return %c0_i32, %c0_i32_0 : i32, i32
  }
  func.func @transform_2(%arg0: i32) -> (i32, i32) {
    %c0_i32 = arith.constant 0 : i32
    %c0_i32_0 = arith.constant 0 : i32
    %c0_i32_1 = arith.constant 0 : i32
    return %c0_i32, %c0_i32_0 : i32, i32
  }
  func.func @transform_3(%arg0: i32) -> (i32, i32) {
    %c0_i32 = arith.constant 0 : i32
    %c0_i32_0 = arith.constant 0 : i32
    %c0_i32_1 = arith.constant 0 : i32
    return %c0_i32, %c0_i32_0 : i32, i32
  }
  func.func @transform_4(%arg0: i32) -> (i32, i32) {
    %c0_i32 = arith.constant 0 : i32
    %c0_i32_0 = arith.constant 0 : i32
    return %arg0, %c0_i32 : i32, i32
  }
}

module attributes {stable_mosaic.version = 11 : i64} {
  func.func @_fused_conv_kernel(%arg0: i32, %arg1: memref<8x1024xbf16, #tpu.memory_space<vmem>>, %arg2: memref<1024x1xbf16, #tpu.memory_space<vmem>>, %arg3: memref<1x1xf32, #tpu.memory_space<vmem>>, %arg4: memref<1x1xf32, #tpu.memory_space<vmem>>, %arg5: memref<8x1xf32, #tpu.memory_space<vmem>>) attributes {dimension_semantics = [#tpu.dimension_semantics<parallel>], iteration_bounds = array<i64: 1>, scalar_prefetch = 0 : i64, scratch_operands = 0 : i64, tpu.core_type = #tpu.core_type<tc>, window_params = [{transform_indices = @transform_0, window_bounds = array<i64: 8, 1024>}, {pipeline_mode = #tpu.pipeline_mode<synchronous>, transform_indices = @transform_1, window_bounds = array<i64: 1024, 1>}, {pipeline_mode = #tpu.pipeline_mode<synchronous>, transform_indices = @transform_2, window_bounds = array<i64: 1, 1>}, {pipeline_mode = #tpu.pipeline_mode<synchronous>, transform_indices = @transform_3, window_bounds = array<i64: 1, 1>}, {transform_indices = @transform_4, window_bounds = array<i64: 8, 1>}]} {
    %c0 = arith.constant 0 : index
    %c0_0 = arith.constant 0 : index
    %0 = vector.load %arg1[%c0, %c0_0] : memref<8x1024xbf16, #tpu.memory_space<vmem>>, vector<8x1024xbf16>
    %c0_1 = arith.constant 0 : index
    %c0_2 = arith.constant 0 : index
    %1 = vector.load %arg2[%c0_1, %c0_2] : memref<1024x1xbf16, #tpu.memory_space<vmem>>, vector<1024x1xbf16>
    %cst = arith.constant dense<0.000000e+00> : vector<8x1xf32>
    %2 = tpu.matmul %0, %1, %cst {dimension_numbers = #tpu.dot_dimension_numbers<[1], [0], [0], [1], [0, 0, 1, 1], [], []>} : vector<8x1024xbf16>, vector<1024x1xbf16>, vector<8x1xf32> -> vector<8x1xf32>
    %c0_3 = arith.constant 0 : index
    %c0_4 = arith.constant 0 : index
    %3 = vector.load %arg3[%c0_3, %c0_4] : memref<1x1xf32, #tpu.memory_space<vmem>>, vector<1x1xf32>
    %4 = vector.broadcast %3 : vector<1x1xf32> to vector<8x1xf32>
    %5 = arith.mulf %2, %4 : vector<8x1xf32>
    %c0_5 = arith.constant 0 : index
    %c0_6 = arith.constant 0 : index
    %6 = vector.load %arg4[%c0_5, %c0_6] : memref<1x1xf32, #tpu.memory_space<vmem>>, vector<1x1xf32>
    %7 = vector.broadcast %6 : vector<1x1xf32> to vector<8x1xf32>
    %8 = arith.addf %5, %7 : vector<8x1xf32>
    %c0_7 = arith.constant 0 : index
    %c0_8 = arith.constant 0 : index
    %9 = vector.load %arg5[%c0_7, %c0_8] : memref<8x1xf32, #tpu.memory_space<vmem>>, vector<8x1xf32>
    tpu.vector_store %arg5[%c0_7, %c0_8], %8 {strides = array<i32>} : memref<8x1xf32, #tpu.memory_space<vmem>>, vector<8x1xf32>,
    return
  }
  func.func @transform_0(%arg0: i32) -> (i32, i32) {
    %c0_i32 = arith.constant 0 : i32
    %c0_i32_0 = arith.constant 0 : i32
    return %arg0, %c0_i32 : i32, i32
  }
  func.func @transform_1(%arg0: i32) -> (i32, i32) {
    %c0_i32 = arith.constant 0 : i32
    %c0_i32_0 = arith.constant 0 : i32
    %c0_i32_1 = arith.constant 0 : i32
    return %c0_i32, %c0_i32_0 : i32, i32
  }
  func.func @transform_2(%arg0: i32) -> (i32, i32) {
    %c0_i32 = arith.constant 0 : i32
    %c0_i32_0 = arith.constant 0 : i32
    %c0_i32_1 = arith.constant 0 : i32
    return %c0_i32, %c0_i32_0 : i32, i32
  }
  func.func @transform_3(%arg0: i32) -> (i32, i32) {
    %c0_i32 = arith.constant 0 : i32
    %c0_i32_0 = arith.constant 0 : i32
    %c0_i32_1 = arith.constant 0 : i32
    return %c0_i32, %c0_i32_0 : i32, i32
  }
  func.func @transform_4(%arg0: i32) -> (i32, i32) {
    %c0_i32 = arith.constant 0 : i32
    %c0_i32_0 = arith.constant 0 : i32
    return %arg0, %c0_i32 : i32, i32
  }
}

</mosaic_0001>

<llo_original>
// kernel: _lambda_.5
$region0: #{_lambda_.5}
  #allocation0 [shape = 'u32[]', space=smem, size = 0x4, offset = 0x4, fixed_abs, tag = 'smem constant byte address 0x4 - core index']
  #allocation1 [shape = 'u32[72,128]{1,0:T(1,128)}', space=vmem, size = 0x9000, scoped, tag = 'internal scratch']
  %s0 = inlined_call_operand.vmem [shape: bf16[512,48], index: 0, kind: input, shape index: {}]
  %s1 = inlined_call_operand.vmem [shape: bf16[48,8], index: 1, kind: input, shape index: {}]
  %s2 = inlined_call_operand.vmem [shape: f32[1,8], index: 2, kind: input, shape index: {}]
  %s3 = inlined_call_operand.vmem [shape: f32[1,8], index: 3, kind: input, shape index: {}]
  %s4 = inlined_call_operand.vmem [shape: bf16[512,8], index: 4, kind: output, shape index: {}]
  %s5 = sld [smem:[#allocation0]]
  $region49: #{_lambda_.5} parent=0
    _
  %s7 = ssub.s32 1, %s5
  %s8 = scalar_select 0, %s7, %s5
  loop: start=0, step=1, limit=4
  $region2: #{_lambda_.5} parent=0 // loop_pre_header
    _
  $region3: #{_lambda_.5} parent=0 // loop_header
    %s10 = sphi 0, %s14
    %p11 = scmp.ge.s32.totalorder %s10, 4
    %s20 = sphi 0, %s22
    %s23 = sphi 0, %s20
    %s24 = sphi 0, %s23
    %s40 = sphi 0, %s24
    %s44 = sphi 0, %s44
    %s46 = sphi 0, %s44
    %s47 = sphi 0, %s46
    %s61 = sphi 0, %s47
    %s65 = sphi 0, %s65
    %s67 = sphi 0, %s65
    %s68 = sphi 0, %s67
    %s82 = sphi 0, %s68
    %s86 = sphi 0, %s86
    %s88 = sphi 0, %s86
    %s89 = sphi 0, %s88
    %s103 = sphi 0, %s89
    %s109 = sphi 0, %s111
    %s112 = sphi 0, %s109
    %s113 = sphi 0, %s112
    %s129 = sphi 0, %s113
  $region4: #{_lambda_.5} parent=0 // loop_header_branch
    %13 = sbr.rel (%p11) target = $region8
  $region5: #{_lambda_.5} parent=0 // loop_body
    %s15 = ssub.s32 %s10, 1
    %s16 = ssub.s32 %s10, 2
    %s17 = sadd.s32 %s10, 1
    %s18 = ssub.s32 %s10, %s17
    %p19 = scmp.eq.s32.totalorder %s18, 0
    %s21 = sadd.s32 %s20, 1
    %s22 = scalar_select %p19, %s20, %s21
    %p25 = pneg %p19
    %p26 = scmp.eq.s32.totalorder %s10, 1
    %p27 = por %p25, %p26
    %p28 = scmp.ne.s32.totalorder %s20, %s23
    %p29 = scmp.eq.s32.totalorder %s10, 0
    %p30 = por %p28, %p29
    %p31 = scmp.ne.s32.totalorder %s20, %s23
    %p32 = scmp.eq.s32.totalorder %s15, 1
    %p33 = por %p31, %p32
    %p34 = scmp.ne.s32.totalorder %s23, %s24
    %p35 = scmp.eq.s32.totalorder %s15, 0
    %p36 = por %p34, %p35
    %p37 = scmp.ne.s32.totalorder %s23, %s24
    %p38 = scmp.eq.s32.totalorder %s16, 1
    %p39 = por %p37, %p38
    %p41 = scmp.ne.s32.totalorder %s24, %s40
    %p42 = scmp.eq.s32.totalorder %s16, 0
    %p43 = por %p41, %p42
    %s45 = sadd.s32 %s44, 1
    %p48 = scmp.eq.s32.totalorder %s10, 1
    %p49 = scmp.ne.s32.totalorder %s44, %s46
    %p50 = scmp.eq.s32.totalorder %s10, 0
    %p51 = por %p49, %p50
    %p52 = scmp.ne.s32.totalorder %s44, %s46
    %p53 = scmp.eq.s32.totalorder %s15, 1
    %p54 = por %p52, %p53
    %p55 = scmp.ne.s32.totalorder %s46, %s47
    %p56 = scmp.eq.s32.totalorder %s15, 0
    %p57 = por %p55, %p56
    %p58 = scmp.ne.s32.totalorder %s46, %s47
    %p59 = scmp.eq.s32.totalorder %s16, 1
    %p60 = por %p58, %p59
    %p62 = scmp.ne.s32.totalorder %s47, %s61
    %p63 = scmp.eq.s32.totalorder %s16, 0
    %p64 = por %p62, %p63
    %s66 = sadd.s32 %s65, 1
    %p69 = scmp.eq.s32.totalorder %s10, 1
    %p70 = scmp.ne.s32.totalorder %s65, %s67
    %p71 = scmp.eq.s32.totalorder %s10, 0
    %p72 = por %p70, %p71
    %p73 = scmp.ne.s32.totalorder %s65, %s67
    %p74 = scmp.eq.s32.totalorder %s15, 1
    %p75 = por %p73, %p74
    %p76 = scmp.ne.s32.totalorder %s67, %s68
    %p77 = scmp.eq.s32.totalorder %s15, 0
    %p78 = por %p76, %p77
    %p79 = scmp.ne.s32.totalorder %s67, %s68
    %p80 = scmp.eq.s32.totalorder %s16, 1
    %p81 = por %p79, %p80
    %p83 = scmp.ne.s32.totalorder %s68, %s82
    %p84 = scmp.eq.s32.totalorder %s16, 0
    %p85 = por %p83, %p84
    %s87 = sadd.s32 %s86, 1
    %p90 = scmp.eq.s32.totalorder %s10, 1
    %p91 = scmp.ne.s32.totalorder %s86, %s88
    %p92 = scmp.eq.s32.totalorder %s10, 0
    %p93 = por %p91, %p92
    %p94 = scmp.ne.s32.totalorder %s86, %s88
    %p95 = scmp.eq.s32.totalorder %s15, 1
    %p96 = por %p94, %p95
    %p97 = scmp.ne.s32.totalorder %s88, %s89
    %p98 = scmp.eq.s32.totalorder %s15, 0
    %p99 = por %p97, %p98
    %p100 = scmp.ne.s32.totalorder %s88, %s89
    %p101 = scmp.eq.s32.totalorder %s16, 1
    %p102 = por %p100, %p101
    %p104 = scmp.ne.s32.totalorder %s89, %s103
    %p105 = scmp.eq.s32.totalorder %s16, 0
    %p106 = por %p104, %p105
    %s107 = ssub.s32 %s10, %s17
    %p108 = scmp.eq.s32.totalorder %s107, 0
    %s110 = sadd.s32 %s109, 1
    %s111 = scalar_select %p108, %s109, %s110
    %p114 = pneg %p108
    %p115 = scmp.eq.s32.totalorder %s10, 1
    %p116 = por %p114, %p115
    %p117 = scmp.ne.s32.totalorder %s109, %s112
    %p118 = scmp.eq.s32.totalorder %s10, 0
    %p119 = por %p117, %p118
    %p120 = scmp.ne.s32.totalorder %s109, %s112
    %p121 = scmp.eq.s32.totalorder %s15, 1
    %p122 = por %p120, %p121
    %p123 = scmp.ne.s32.totalorder %s112, %s113
    %p124 = scmp.eq.s32.totalorder %s15, 0
    %p125 = por %p123, %p124
    %p126 = scmp.ne.s32.totalorder %s112, %s113
    %p127 = scmp.eq.s32.totalorder %s16, 1
    %p128 = por %p126, %p127
    %p130 = scmp.ne.s32.totalorder %s113, %s129
    %p131 = scmp.eq.s32.totalorder %s16, 0
    %p132 = por %p130, %p131
    %p133 = scmp.le.s32.totalorder 1, %s10
    %p134 = scmp.lt.s32.totalorder %s10, 3
    %p135 = pnand %p133, %p134
    %p136 = pneg %p135
    // Predicated region
    $region9: #{_lambda_.5} parent=5 // pred_check
      _
    $region10: #{_lambda_.5} parent=5 // pred_check_branch
      %138 = sbr.rel (%p135) target = $region12
    $region11: #{_lambda_.5} parent=5 // pred_region
      %s139 = ssub.s32 %s10, 1
      // Predicated region
      $region13: #{_lambda_.5} parent=11 // pred_check
        %p140 = pneg %p57
      $region14: #{_lambda_.5} parent=11 // pred_check_branch
        %142 = sbr.rel (%p140) target = $region16
      $region15: #{_lambda_.5} parent=11 // pred_region
        _
      $region16: #{_lambda_.5} parent=11 // pred_fallthru
        _
      // Predicated region
      $region17: #{_lambda_.5} parent=11 // pred_check
        %p143 = pneg %p78
      $region18: #{_lambda_.5} parent=11 // pred_check_branch
        %145 = sbr.rel (%p143) target = $region20
      $region19: #{_lambda_.5} parent=11 // pred_region
        _
      $region20: #{_lambda_.5} parent=11 // pred_fallthru
        _
      // Predicated region
      $region21: #{_lambda_.5} parent=11 // pred_check
        %p146 = pneg %p99
      $region22: #{_lambda_.5} parent=11 // pred_check_branch
        %148 = sbr.rel (%p146) target = $region24
      $region23: #{_lambda_.5} parent=11 // pred_region
        _
      $region24: #{_lambda_.5} parent=11 // pred_fallthru
        _
    $region12: #{_lambda_.5} parent=5 // pred_fallthru
      _
    %p149 = scmp.lt.s32.totalorder %s10, 2
    // Predicated region
    $region25: #{_lambda_.5} parent=5 // pred_check
      %p150 = pneg %p149
    $region26: #{_lambda_.5} parent=5 // pred_check_branch
      %152 = sbr.rel (%p150) target = $region28
    $region27: #{_lambda_.5} parent=5 // pred_region
      // Predicated region
      $region29: #{_lambda_.5} parent=27 // pred_check
        %p153 = pneg %p30
      $region30: #{_lambda_.5} parent=27 // pred_check_branch
        %155 = sbr.rel (%p153) target = $region32
      $region31: #{_lambda_.5} parent=27 // pred_region
        %s156 = smul.u32 32, %s10
        %p157 = scmp.lt.s32.totalorder %s156, 63
        %s158 = scalar_select %p157, %s156, 63
        %s159 = smul.addr %s158, 4
        %s160 = scalar_lea.vmem %s0, %s159
        %s161 = smul.u32 32, %s10
      $region32: #{_lambda_.5} parent=27 // pred_fallthru
        _
    $region28: #{_lambda_.5} parent=5 // pred_fallthru
      _
    %p162 = scmp.le.s32.totalorder 1, %s10
    %p163 = scmp.lt.s32.totalorder %s10, 3
    %p164 = pnand %p162, %p163
    %p165 = pneg %p164
    // Predicated region
    $region33: #{_lambda_.5} parent=5 // pred_check
      _
    $region34: #{_lambda_.5} parent=5 // pred_check_branch
      %167 = sbr.rel (%p164) target = $region36
    $region35: #{_lambda_.5} parent=5 // pred_region
      %s168 = ssub.s32 %s10, 1
      %s169 = smul.u32 32, %s15
      %p170 = scmp.lt.s32.totalorder %s169, 63
      %s171 = scalar_select %p170, %s169, 63
      %s172 = smul.addr %s171, 4
      %s173 = scalar_lea.vmem %s0, %s172
      %p174 = pneg %p36
      %p175 = pneg %p33
      %p176 = pneg %p57
      %p177 = pneg %p54
      %p178 = pneg %p78
      %p179 = pneg %p75
      %p180 = pneg %p99
      %p181 = pneg %p96
      %p182 = pneg %p125
      %p183 = pneg %p122
      %s184 = smul.u32 32, %s15
      %p185 = scmp.lt.s32.totalorder %s184, 63
      %s186 = scalar_select %p185, %s184, 63
      %s187 = smul.addr %s186, 4
      %s188 = scalar_lea.vmem %s4, %s187
      %s189 = smul.u32 32, %s15
      %p190 = scmp.lt.s32.totalorder %s189, 63
      %s191 = scalar_select %p190, %s189, 63
      %s192 = smul.addr %s191, 4
      %s193 = scalar_lea.vmem %s0, %s192
      %s194 = smul.u32 32, %s15
      %s195 = smul.u32 32, %s15
      %p196 = scmp.lt.s32.totalorder %s195, 63
      %s197 = scalar_select %p196, %s195, 63
      %s198 = smul.addr %s197, 4
      %s199 = scalar_lea.vmem %s4, %s198
      %s200 = smul.u32 32, %s15
      %v202 = vld [vmem:[%s193] sm:$0xf]
      %v203 = vld [vmem:[%s193 + $0x4] sm:$0xf]
      %v204 = vld [vmem:[%s193 + $0x8] sm:$0xf]
      %v205 = vld [vmem:[%s193 + $0xc] sm:$0xf]
      %v206 = vld [vmem:[%s193 + $0x10] sm:$0xf]
      %v207 = vld [vmem:[%s193 + $0x14] sm:$0xf]
      %v208 = vld [vmem:[%s193 + $0x18] sm:$0xf]
      %v209 = vld [vmem:[%s193 + $0x1c] sm:$0xf]
      %v210 = vld [vmem:[%s193 + $0x20] sm:$0xf]
      %v211 = vld [vmem:[%s193 + $0x24] sm:$0xf]
      %v212 = vld [vmem:[%s193 + $0x28] sm:$0xf]
      %v213 = vld [vmem:[%s193 + $0x2c] sm:$0xf]
      %v214 = vld [vmem:[%s193 + $0x30] sm:$0xf]
      %v215 = vld [vmem:[%s193 + $0x34] sm:$0xf]
      %v216 = vld [vmem:[%s193 + $0x38] sm:$0xf]
      %v217 = vld [vmem:[%s193 + $0x3c] sm:$0xf]
      %v218 = vld [vmem:[%s193 + $0x40] sm:$0xf]
      %v219 = vld [vmem:[%s193 + $0x44] sm:$0xf]
      %v220 = vld [vmem:[%s193 + $0x48] sm:$0xf]
      %v221 = vld [vmem:[%s193 + $0x4c] sm:$0xf]
      %v222 = vld [vmem:[%s193 + $0x50] sm:$0xf]
      %v223 = vld [vmem:[%s193 + $0x54] sm:$0xf]
      %v224 = vld [vmem:[%s193 + $0x58] sm:$0xf]
      %v225 = vld [vmem:[%s193 + $0x5c] sm:$0xf]
      %v226 = vld [vmem:[%s193 + $0x60] sm:$0xf]
      %v227 = vld [vmem:[%s193 + $0x64] sm:$0xf]
      %v228 = vld [vmem:[%s193 + $0x68] sm:$0xf]
      %v229 = vld [vmem:[%s193 + $0x6c] sm:$0xf]
      %v230 = vld [vmem:[%s193 + $0x70] sm:$0xf]
      %v231 = vld [vmem:[%s193 + $0x74] sm:$0xf]
      %v232 = vld [vmem:[%s193 + $0x78] sm:$0xf]
      %v233 = vld [vmem:[%s193 + $0x7c] sm:$0xf]
      %v234 = vld [vmem:[%s1] sm:$0xf]
      %v235 = vld [vmem:[%s1 + $0x4] sm:$0xf]
      %v236 = vld [vmem:[%s1 + $0x8] sm:$0xf]
      %v237 = vld [vmem:[%s1 + $0xc] sm:$0xf]
      %v238 = vld [vmem:[%s1 + $0x10] sm:$0xf]
      %v239 = vld [vmem:[%s1 + $0x14] sm:$0xf]
      %v272 = vunpack.c.l.b16 %v202
      %v273 = vunpack.c.l.b16 %v203
      %v274 = vunpack.c.l.b16 %v204
      %v275 = vunpack.c.l.b16 %v205
      %v276 = vunpack.c.l.b16 %v206
      %v277 = vunpack.c.l.b16 %v207
      %v278 = vunpack.c.l.b16 %v208
      %v279 = vunpack.c.l.b16 %v209
      %v280 = vunpack.c.l.b16 %v210
      %v281 = vunpack.c.l.b16 %v211
      %v282 = vunpack.c.l.b16 %v212
      %v283 = vunpack.c.l.b16 %v213
      %v284 = vunpack.c.l.b16 %v214
      %v285 = vunpack.c.l.b16 %v215
      %v286 = vunpack.c.l.b16 %v216
      %v287 = vunpack.c.l.b16 %v217
      %v288 = vunpack.c.l.b16 %v218
      %v289 = vunpack.c.l.b16 %v219
      %v290 = vunpack.c.l.b16 %v220
      %v291 = vunpack.c.l.b16 %v221
      %v292 = vunpack.c.l.b16 %v222
      %v293 = vunpack.c.l.b16 %v223
      %v294 = vunpack.c.l.b16 %v224
      %v295 = vunpack.c.l.b16 %v225
      %v296 = vunpack.c.l.b16 %v226
      %v297 = vunpack.c.l.b16 %v227
      %v298 = vunpack.c.l.b16 %v228
      %v299 = vunpack.c.l.b16 %v229
      %v300 = vunpack.c.l.b16 %v230
      %v301 = vunpack.c.l.b16 %v231
      %v302 = vunpack.c.l.b16 %v232
      %v303 = vunpack.c.l.b16 %v233
      %v304 = vpack.c.b16 %v273, %v272
      %v305 = vpack.c.b16 %v275, %v274
      %v306 = vpack.c.b16 %v277, %v276
      %v307 = vpack.c.b16 %v279, %v278
      %v308 = vpack.c.b16 %v281, %v280
      %v309 = vpack.c.b16 %v283, %v282
      %v310 = vpack.c.b16 %v285, %v284
      %v311 = vpack.c.b16 %v287, %v286
      %v312 = vpack.c.b16 %v289, %v288
      %v313 = vpack.c.b16 %v291, %v290
      %v314 = vpack.c.b16 %v293, %v292
      %v315 = vpack.c.b16 %v295, %v294
      %v316 = vpack.c.b16 %v297, %v296
      %v317 = vpack.c.b16 %v299, %v298
      %v318 = vpack.c.b16 %v301, %v300
      %v319 = vpack.c.b16 %v303, %v302
      %v326 = vunpack.c.l.b16 %v234
      %v327 = vunpack.c.l.b16 %v235
      %v328 = vunpack.c.l.b16 %v236
      %v329 = vunpack.c.l.b16 %v237
      %v330 = vunpack.c.l.b16 %v238
      %v331 = vunpack.c.l.b16 %v239
      %v332 = vpack.c.b16 %v327, %v326
      %v333 = vpack.c.b16 %v329, %v328
      %v334 = vpack.c.b16 %v331, %v330
      %vm338 = vcmask 392192
      %v340 = vsel %vm338, %v304, 0
      %v343 = vsel %vm338, %v305, 0
      %v346 = vsel %vm338, %v306, 0
      %v349 = vsel %vm338, %v307, 0
      %v352 = vsel %vm338, %v308, 0
      %v355 = vsel %vm338, %v309, 0
      %v358 = vsel %vm338, %v310, 0
      %v361 = vsel %vm338, %v311, 0
      %v364 = vsel %vm338, %v312, 0
      %v367 = vsel %vm338, %v313, 0
      %v370 = vsel %vm338, %v314, 0
      %v373 = vsel %vm338, %v315, 0
      %v376 = vsel %vm338, %v316, 0
      %v379 = vsel %vm338, %v317, 0
      %v382 = vsel %vm338, %v318, 0
      %v385 = vsel %vm338, %v319, 0
      %387 = vmatpush.bf16.msra.mxu0 0
      %388 = vmatpush.bf16.msra.mxu0 0
      %389 = vmatpush.bf16.msra.mxu0 0
      %390 = vmatpush.bf16.msra.mxu0 0
      %391 = vmatpush.bf16.msra.mxu0 0
      %392 = vmatpush.bf16.msra.mxu0 %v334
      %393 = vmatpush.bf16.msra.mxu0 %v333
      %394 = vmatpush.bf16.msra.mxu0 %v332
      %395 = vmatmul.bf16.gmra.mxu0 %v340
      %v396 = vpop.f32.mrf.mxu0
      %v397 = vadd.f32 0.0, %v396
      %v398 = vpop.f32.mrf.mxu0
      %v399 = vadd.f32 0.0, %v398
      %400 = vmatmul.bf16.gmra.mxu0 %v343
      %v401 = vpop.f32.mrf.mxu0
      %v402 = vadd.f32 0.0, %v401
      %v403 = vpop.f32.mrf.mxu0
      %v404 = vadd.f32 0.0, %v403
      %405 = vmatmul.bf16.gmra.mxu0 %v346
      %v406 = vpop.f32.mrf.mxu0
      %v407 = vadd.f32 0.0, %v406
      %v408 = vpop.f32.mrf.mxu0
      %v409 = vadd.f32 0.0, %v408
      %410 = vmatmul.bf16.gmra.mxu0 %v349
      %v411 = vpop.f32.mrf.mxu0
      %v412 = vadd.f32 0.0, %v411
      %v413 = vpop.f32.mrf.mxu0
      %v414 = vadd.f32 0.0, %v413
      %415 = vmatmul.bf16.gmra.mxu0 %v352
      %v416 = vpop.f32.mrf.mxu0
      %v417 = vadd.f32 0.0, %v416
      %v418 = vpop.f32.mrf.mxu0
      %v419 = vadd.f32 0.0, %v418
      %420 = vmatmul.bf16.gmra.mxu0 %v355
      %v421 = vpop.f32.mrf.mxu0
      %v422 = vadd.f32 0.0, %v421
      %v423 = vpop.f32.mrf.mxu0
      %v424 = vadd.f32 0.0, %v423
      %425 = vmatmul.bf16.gmra.mxu0 %v358
      %v426 = vpop.f32.mrf.mxu0
      %v427 = vadd.f32 0.0, %v426
      %v428 = vpop.f32.mrf.mxu0
      %v429 = vadd.f32 0.0, %v428
      %430 = vmatmul.bf16.gmra.mxu0 %v361
      %v431 = vpop.f32.mrf.mxu0
      %v432 = vadd.f32 0.0, %v431
      %v433 = vpop.f32.mrf.mxu0
      %v434 = vadd.f32 0.0, %v433
      %435 = vmatmul.bf16.gmra.mxu0 %v364
      %v436 = vpop.f32.mrf.mxu0
      %v437 = vadd.f32 0.0, %v436
      %v438 = vpop.f32.mrf.mxu0
      %v439 = vadd.f32 0.0, %v438
      %440 = vmatmul.bf16.gmra.mxu0 %v367
      %v441 = vpop.f32.mrf.mxu0
      %v442 = vadd.f32 0.0, %v441
      %v443 = vpop.f32.mrf.mxu0
      %v444 = vadd.f32 0.0, %v443
      %445 = vmatmul.bf16.gmra.mxu0 %v370
      %v446 = vpop.f32.mrf.mxu0
      %v447 = vadd.f32 0.0, %v446
      %v448 = vpop.f32.mrf.mxu0
      %v449 = vadd.f32 0.0, %v448
      %450 = vmatmul.bf16.gmra.mxu0 %v373
      %v451 = vpop.f32.mrf.mxu0
      %v452 = vadd.f32 0.0, %v451
      %v453 = vpop.f32.mrf.mxu0
      %v454 = vadd.f32 0.0, %v453
      %455 = vmatmul.bf16.gmra.mxu0 %v376
      %v456 = vpop.f32.mrf.mxu0
      %v457 = vadd.f32 0.0, %v456
      %v458 = vpop.f32.mrf.mxu0
      %v459 = vadd.f32 0.0, %v458
      %460 = vmatmul.bf16.gmra.mxu0 %v379
      %v461 = vpop.f32.mrf.mxu0
      %v462 = vadd.f32 0.0, %v461
      %v463 = vpop.f32.mrf.mxu0
      %v464 = vadd.f32 0.0, %v463
      %465 = vmatmul.bf16.gmra.mxu0 %v382
      %v466 = vpop.f32.mrf.mxu0
      %v467 = vadd.f32 0.0, %v466
      %v468 = vpop.f32.mrf.mxu0
      %v469 = vadd.f32 0.0, %v468
      %470 = vmatmul.bf16.gmra.mxu0 %v385
      %v471 = vpop.f32.mrf.mxu0
      %v472 = vadd.f32 0.0, %v471
      %v473 = vpop.f32.mrf.mxu0
      %v474 = vadd.f32 0.0, %v473
      %475 = vdwg.mxu0
      %v476 = vld [vmem:[%s2] sm:$0x1]
      %v478 = vperm.slane %v476, 0
      %v480 = vmul.f32 %v397, %v478
      %v481 = vmul.f32 %v399, %v478
      %v482 = vmul.f32 %v402, %v478
      %v483 = vmul.f32 %v404, %v478
      %v484 = vmul.f32 %v407, %v478
      %v485 = vmul.f32 %v409, %v478
      %v486 = vmul.f32 %v412, %v478
      %v487 = vmul.f32 %v414, %v478
      %v488 = vmul.f32 %v417, %v478
      %v489 = vmul.f32 %v419, %v478
      %v490 = vmul.f32 %v422, %v478
      %v491 = vmul.f32 %v424, %v478
      %v492 = vmul.f32 %v427, %v478
      %v493 = vmul.f32 %v429, %v478
      %v494 = vmul.f32 %v432, %v478
      %v495 = vmul.f32 %v434, %v478
      %v496 = vmul.f32 %v437, %v478
      %v497 = vmul.f32 %v439, %v478
      %v498 = vmul.f32 %v442, %v478
      %v499 = vmul.f32 %v444, %v478
      %v500 = vmul.f32 %v447, %v478
      %v501 = vmul.f32 %v449, %v478
      %v502 = vmul.f32 %v452, %v478
      %v503 = vmul.f32 %v454, %v478
      %v504 = vmul.f32 %v457, %v478
      %v505 = vmul.f32 %v459, %v478
      %v506 = vmul.f32 %v462, %v478
      %v507 = vmul.f32 %v464, %v478
      %v508 = vmul.f32 %v467, %v478
      %v509 = vmul.f32 %v469, %v478
      %v510 = vmul.f32 %v472, %v478
      %v511 = vmul.f32 %v474, %v478
      %v512 = vld [vmem:[%s3] sm:$0x1]
      %v514 = vperm.slane %v512, 0
      %v516 = vadd.f32 %v480, %v514
      %v517 = vadd.f32 %v481, %v514
      %v518 = vadd.f32 %v482, %v514
      %v519 = vadd.f32 %v483, %v514
      %v520 = vadd.f32 %v484, %v514
      %v521 = vadd.f32 %v485, %v514
      %v522 = vadd.f32 %v486, %v514
      %v523 = vadd.f32 %v487, %v514
      %v524 = vadd.f32 %v488, %v514
      %v525 = vadd.f32 %v489, %v514
      %v526 = vadd.f32 %v490, %v514
      %v527 = vadd.f32 %v491, %v514
      %v528 = vadd.f32 %v492, %v514
      %v529 = vadd.f32 %v493, %v514
      %v530 = vadd.f32 %v494, %v514
      %v531 = vadd.f32 %v495, %v514
      %v532 = vadd.f32 %v496, %v514
      %v533 = vadd.f32 %v497, %v514
      %v534 = vadd.f32 %v498, %v514
      %v535 = vadd.f32 %v499, %v514
      %v536 = vadd.f32 %v500, %v514
      %v537 = vadd.f32 %v501, %v514
      %v538 = vadd.f32 %v502, %v514
      %v539 = vadd.f32 %v503, %v514
      %v540 = vadd.f32 %v504, %v514
      %v541 = vadd.f32 %v505, %v514
      %v542 = vadd.f32 %v506, %v514
      %v543 = vadd.f32 %v507, %v514
      %v544 = vadd.f32 %v508, %v514
      %v545 = vadd.f32 %v509, %v514
      %v546 = vadd.f32 %v510, %v514
      %v547 = vadd.f32 %v511, %v514
      %vm548 = vcmp.ge.f32.partialorder %v516, 0.0
      %vm549 = vcmp.ge.f32.partialorder %v517, 0.0
      %vm550 = vcmp.ge.f32.partialorder %v518, 0.0
      %vm551 = vcmp.ge.f32.partialorder %v519, 0.0
      %vm552 = vcmp.ge.f32.partialorder %v520, 0.0
      %vm553 = vcmp.ge.f32.partialorder %v521, 0.0
      %vm554 = vcmp.ge.f32.partialorder %v522, 0.0
      %vm555 = vcmp.ge.f32.partialorder %v523, 0.0
      %vm556 = vcmp.ge.f32.partialorder %v524, 0.0
      %vm557 = vcmp.ge.f32.partialorder %v525, 0.0
      %vm558 = vcmp.ge.f32.partialorder %v526, 0.0
      %vm559 = vcmp.ge.f32.partialorder %v527, 0.0
      %vm560 = vcmp.ge.f32.partialorder %v528, 0.0
      %vm561 = vcmp.ge.f32.partialorder %v529, 0.0
      %vm562 = vcmp.ge.f32.partialorder %v530, 0.0
      %vm563 = vcmp.ge.f32.partialorder %v531, 0.0
      %vm564 = vcmp.ge.f32.partialorder %v532, 0.0
      %vm565 = vcmp.ge.f32.partialorder %v533, 0.0
      %vm566 = vcmp.ge.f32.partialorder %v534, 0.0
      %vm567 = vcmp.ge.f32.partialorder %v535, 0.0
      %vm568 = vcmp.ge.f32.partialorder %v536, 0.0
      %vm569 = vcmp.ge.f32.partialorder %v537, 0.0
      %vm570 = vcmp.ge.f32.partialorder %v538, 0.0
      %vm571 = vcmp.ge.f32.partialorder %v539, 0.0
      %vm572 = vcmp.ge.f32.partialorder %v540, 0.0
      %vm573 = vcmp.ge.f32.partialorder %v541, 0.0
      %vm574 = vcmp.ge.f32.partialorder %v542, 0.0
      %vm575 = vcmp.ge.f32.partialorder %v543, 0.0
      %vm576 = vcmp.ge.f32.partialorder %v544, 0.0
      %vm577 = vcmp.ge.f32.partialorder %v545, 0.0
      %vm578 = vcmp.ge.f32.partialorder %v546, 0.0
      %vm579 = vcmp.ge.f32.partialorder %v547, 0.0
      %v580 = vmul.f32 %v516, 0.2
      %v581 = vmul.f32 %v517, 0.2
      %v582 = vmul.f32 %v518, 0.2
      %v583 = vmul.f32 %v519, 0.2
      %v584 = vmul.f32 %v520, 0.2
      %v585 = vmul.f32 %v521, 0.2
      %v586 = vmul.f32 %v522, 0.2
      %v587 = vmul.f32 %v523, 0.2
      %v588 = vmul.f32 %v524, 0.2
      %v589 = vmul.f32 %v525, 0.2
      %v590 = vmul.f32 %v526, 0.2
      %v591 = vmul.f32 %v527, 0.2
      %v592 = vmul.f32 %v528, 0.2
      %v593 = vmul.f32 %v529, 0.2
      %v594 = vmul.f32 %v530, 0.2
      %v595 = vmul.f32 %v531, 0.2
      %v596 = vmul.f32 %v532, 0.2
      %v597 = vmul.f32 %v533, 0.2
      %v598 = vmul.f32 %v534, 0.2
      %v599 = vmul.f32 %v535, 0.2
      %v600 = vmul.f32 %v536, 0.2
      %v601 = vmul.f32 %v537, 0.2
      %v602 = vmul.f32 %v538, 0.2
      %v603 = vmul.f32 %v539, 0.2
      %v604 = vmul.f32 %v540, 0.2
      %v605 = vmul.f32 %v541, 0.2
      %v606 = vmul.f32 %v542, 0.2
      %v607 = vmul.f32 %v543, 0.2
      %v608 = vmul.f32 %v544, 0.2
      %v609 = vmul.f32 %v545, 0.2
      %v610 = vmul.f32 %v546, 0.2
      %v611 = vmul.f32 %v547, 0.2
      %v612 = vsel %vm548, %v516, %v580
      %v613 = vsel %vm549, %v517, %v581
      %v614 = vsel %vm550, %v518, %v582
      %v615 = vsel %vm551, %v519, %v583
      %v616 = vsel %vm552, %v520, %v584
      %v617 = vsel %vm553, %v521, %v585
      %v618 = vsel %vm554, %v522, %v586
      %v619 = vsel %vm555, %v523, %v587
      %v620 = vsel %vm556, %v524, %v588
      %v621 = vsel %vm557, %v525, %v589
      %v622 = vsel %vm558, %v526, %v590
      %v623 = vsel %vm559, %v527, %v591
      %v624 = vsel %vm560, %v528, %v592
      %v625 = vsel %vm561, %v529, %v593
      %v626 = vsel %vm562, %v530, %v594
      %v627 = vsel %vm563, %v531, %v595
      %v628 = vsel %vm564, %v532, %v596
      %v629 = vsel %vm565, %v533, %v597
      %v630 = vsel %vm566, %v534, %v598
      %v631 = vsel %vm567, %v535, %v599
      %v632 = vsel %vm568, %v536, %v600
      %v633 = vsel %vm569, %v537, %v601
      %v634 = vsel %vm570, %v538, %v602
      %v635 = vsel %vm571, %v539, %v603
      %v636 = vsel %vm572, %v540, %v604
      %v637 = vsel %vm573, %v541, %v605
      %v638 = vsel %vm574, %v542, %v606
      %v639 = vsel %vm575, %v543, %v607
      %v640 = vsel %vm576, %v544, %v608
      %v641 = vsel %vm577, %v545, %v609
      %v642 = vsel %vm578, %v546, %v610
      %v643 = vsel %vm579, %v547, %v611
      %v644 = vpack.c.bf16 %v612, %v612
      %v645 = vpack.c.bf16 %v613, %v613
      %v646 = vpack.c.bf16 %v614, %v614
      %v647 = vpack.c.bf16 %v615, %v615
      %v648 = vpack.c.bf16 %v616, %v616
      %v649 = vpack.c.bf16 %v617, %v617
      %v650 = vpack.c.bf16 %v618, %v618
      %v651 = vpack.c.bf16 %v619, %v619
      %v652 = vpack.c.bf16 %v620, %v620
      %v653 = vpack.c.bf16 %v621, %v621
      %v654 = vpack.c.bf16 %v622, %v622
      %v655 = vpack.c.bf16 %v623, %v623
      %v656 = vpack.c.bf16 %v624, %v624
      %v657 = vpack.c.bf16 %v625, %v625
      %v658 = vpack.c.bf16 %v626, %v626
      %v659 = vpack.c.bf16 %v627, %v627
      %v660 = vpack.c.bf16 %v628, %v628
      %v661 = vpack.c.bf16 %v629, %v629
      %v662 = vpack.c.bf16 %v630, %v630
      %v663 = vpack.c.bf16 %v631, %v631
      %v664 = vpack.c.bf16 %v632, %v632
      %v665 = vpack.c.bf16 %v633, %v633
      %v666 = vpack.c.bf16 %v634, %v634
      %v667 = vpack.c.bf16 %v635, %v635
      %v668 = vpack.c.bf16 %v636, %v636
      %v669 = vpack.c.bf16 %v637, %v637
      %v670 = vpack.c.bf16 %v638, %v638
      %v671 = vpack.c.bf16 %v639, %v639
      %v672 = vpack.c.bf16 %v640, %v640
      %v673 = vpack.c.bf16 %v641, %v641
      %v674 = vpack.c.bf16 %v642, %v642
      %v675 = vpack.c.bf16 %v643, %v643
      %vm676 = vcmask 60416
      %677 = vst.msk [vmem:[%s199] sm:$0xf] %vm676, %v644
      %678 = vst.msk [vmem:[%s199 + $0x4] sm:$0xf] %vm676, %v645
      %679 = vst.msk [vmem:[%s199 + $0x8] sm:$0xf] %vm676, %v646
      %680 = vst.msk [vmem:[%s199 + $0xc] sm:$0xf] %vm676, %v647
      %681 = vst.msk [vmem:[%s199 + $0x10] sm:$0xf] %vm676, %v648
      %682 = vst.msk [vmem:[%s199 + $0x14] sm:$0xf] %vm676, %v649
      %683 = vst.msk [vmem:[%s199 + $0x18] sm:$0xf] %vm676, %v650
      %684 = vst.msk [vmem:[%s199 + $0x1c] sm:$0xf] %vm676, %v651
      %685 = vst.msk [vmem:[%s199 + $0x20] sm:$0xf] %vm676, %v652
      %686 = vst.msk [vmem:[%s199 + $0x24] sm:$0xf] %vm676, %v653
      %687 = vst.msk [vmem:[%s199 + $0x28] sm:$0xf] %vm676, %v654
      %688 = vst.msk [vmem:[%s199 + $0x2c] sm:$0xf] %vm676, %v655
      %689 = vst.msk [vmem:[%s199 + $0x30] sm:$0xf] %vm676, %v656
      %690 = vst.msk [vmem:[%s199 + $0x34] sm:$0xf] %vm676, %v657
      %691 = vst.msk [vmem:[%s199 + $0x38] sm:$0xf] %vm676, %v658
      %692 = vst.msk [vmem:[%s199 + $0x3c] sm:$0xf] %vm676, %v659
      %693 = vst.msk [vmem:[%s199 + $0x40] sm:$0xf] %vm676, %v660
      %694 = vst.msk [vmem:[%s199 + $0x44] sm:$0xf] %vm676, %v661
      %695 = vst.msk [vmem:[%s199 + $0x48] sm:$0xf] %vm676, %v662
      %696 = vst.msk [vmem:[%s199 + $0x4c] sm:$0xf] %vm676, %v663
      %697 = vst.msk [vmem:[%s199 + $0x50] sm:$0xf] %vm676, %v664
      %698 = vst.msk [vmem:[%s199 + $0x54] sm:$0xf] %vm676, %v665
      %699 = vst.msk [vmem:[%s199 + $0x58] sm:$0xf] %vm676, %v666
      %700 = vst.msk [vmem:[%s199 + $0x5c] sm:$0xf] %vm676, %v667
      %701 = vst.msk [vmem:[%s199 + $0x60] sm:$0xf] %vm676, %v668
      %702 = vst.msk [vmem:[%s199 + $0x64] sm:$0xf] %vm676, %v669
      %703 = vst.msk [vmem:[%s199 + $0x68] sm:$0xf] %vm676, %v670
      %704 = vst.msk [vmem:[%s199 + $0x6c] sm:$0xf] %vm676, %v671
      %705 = vst.msk [vmem:[%s199 + $0x70] sm:$0xf] %vm676, %v672
      %706 = vst.msk [vmem:[%s199 + $0x74] sm:$0xf] %vm676, %v673
      %707 = vst.msk [vmem:[%s199 + $0x78] sm:$0xf] %vm676, %v674
      %708 = vst.msk [vmem:[%s199 + $0x7c] sm:$0xf] %vm676, %v675
      %s709 = smul.u32 32, %s15
      %p710 = scmp.lt.s32.totalorder %s709, 63
      %s711 = scalar_select %p710, %s709, 63
      %s712 = smul.addr %s711, 4
      %s713 = scalar_lea.vmem %s4, %s712
      // Predicated region
      $region37: #{_lambda_.5} parent=35 // pred_check
        %p714 = pneg %p122
      $region38: #{_lambda_.5} parent=35 // pred_check_branch
        %716 = sbr.rel (%p714) target = $region40
      $region39: #{_lambda_.5} parent=35 // pred_region
        %s717 = smul.u32 32, %s15
      $region40: #{_lambda_.5} parent=35 // pred_fallthru
        _
    $region36: #{_lambda_.5} parent=5 // pred_fallthru
      _
    %p718 = scmp.le.s32.totalorder 2, %s10
    // Predicated region
    $region41: #{_lambda_.5} parent=5 // pred_check
      %p719 = pneg %p718
    $region42: #{_lambda_.5} parent=5 // pred_check_branch
      %721 = sbr.rel (%p719) target = $region44
    $region43: #{_lambda_.5} parent=5 // pred_region
      %s722 = ssub.s32 %s10, 2
      // Predicated region
      $region45: #{_lambda_.5} parent=43 // pred_check
        %p723 = pneg %p128
      $region46: #{_lambda_.5} parent=43 // pred_check_branch
        %725 = sbr.rel (%p723) target = $region48
      $region47: #{_lambda_.5} parent=43 // pred_region
        %s726 = smul.u32 32, %s16
        %p727 = scmp.lt.s32.totalorder %s726, 63
        %s728 = scalar_select %p727, %s726, 63
        %s729 = smul.addr %s728, 4
        %s730 = scalar_lea.vmem %s4, %s729
      $region48: #{_lambda_.5} parent=43 // pred_fallthru
        _
    $region44: #{_lambda_.5} parent=5 // pred_fallthru
      _
  $region6: #{_lambda_.5} parent=0 // loop_footer
    %s14 = sadd.s32 1, %s10
  $region7: #{_lambda_.5} parent=0 // loop_footer_branch
    %9 = sbr.rel target = $region3
  $region8: #{_lambda_.5} parent=0 // loop_exit
    _

// kernel: _lambda_.6
$region0: #{_lambda_.6}
  #allocation0 [shape = 'u32[]', space=smem, size = 0x4, offset = 0x4, fixed_abs, tag = 'smem constant byte address 0x4 - core index']
  #allocation1 [shape = 'u32[72,128]{1,0:T(1,128)}', space=vmem, size = 0x9000, scoped, tag = 'internal scratch']
  %s0 = inlined_call_operand.vmem [shape: bf16[128,128], index: 0, kind: input, shape index: {}]
  %s1 = inlined_call_operand.vmem [shape: bf16[128,16], index: 1, kind: input, shape index: {}]
  %s2 = inlined_call_operand.vmem [shape: f32[1,16], index: 2, kind: input, shape index: {}]
  %s3 = inlined_call_operand.vmem [shape: f32[1,16], index: 3, kind: input, shape index: {}]
  %s4 = inlined_call_operand.vmem [shape: bf16[128,16], index: 4, kind: output, shape index: {}]
  %s5 = sld [smem:[#allocation0]]
  $region26: #{_lambda_.6} parent=0
    _
  %s7 = ssub.s32 1, %s5
  %s8 = scalar_select 0, %s7, %s5
  // Predicated region
  $region2: #{_lambda_.6} parent=0 // pred_check
    _
  $region3: #{_lambda_.6} parent=0 // pred_check_branch
    %10 = sbr.rel (0) target = $region5
  $region4: #{_lambda_.6} parent=0 // pred_region
    _
  $region5: #{_lambda_.6} parent=0 // pred_fallthru
    _
  // Predicated region
  $region6: #{_lambda_.6} parent=0 // pred_check
    _
  $region7: #{_lambda_.6} parent=0 // pred_check_branch
    %12 = sbr.rel (0) target = $region9
  $region8: #{_lambda_.6} parent=0 // pred_region
    _
  $region9: #{_lambda_.6} parent=0 // pred_fallthru
    _
  // Predicated region
  $region10: #{_lambda_.6} parent=0 // pred_check
    _
  $region11: #{_lambda_.6} parent=0 // pred_check_branch
    %14 = sbr.rel (0) target = $region13
  $region12: #{_lambda_.6} parent=0 // pred_region
    _
  $region13: #{_lambda_.6} parent=0 // pred_fallthru
    _
  // Predicated region
  $region14: #{_lambda_.6} parent=0 // pred_check
    _
  $region15: #{_lambda_.6} parent=0 // pred_check_branch
    %16 = sbr.rel (0) target = $region17
  $region16: #{_lambda_.6} parent=0 // pred_region
    _
  $region17: #{_lambda_.6} parent=0 // pred_fallthru
    _
  %v17 = vld [vmem:[%s0] sm:$0xf]
  %v18 = vld [vmem:[%s0 + $0x4] sm:$0xf]
  %v19 = vld [vmem:[%s0 + $0x8] sm:$0xf]
  %v20 = vld [vmem:[%s0 + $0xc] sm:$0xf]
  %v21 = vld [vmem:[%s0 + $0x10] sm:$0xf]
  %v22 = vld [vmem:[%s0 + $0x14] sm:$0xf]
  %v23 = vld [vmem:[%s0 + $0x18] sm:$0xf]
  %v24 = vld [vmem:[%s0 + $0x1c] sm:$0xf]
  %v25 = vld [vmem:[%s0 + $0x20] sm:$0xf]
  %v26 = vld [vmem:[%s0 + $0x24] sm:$0xf]
  %v27 = vld [vmem:[%s0 + $0x28] sm:$0xf]
  %v28 = vld [vmem:[%s0 + $0x2c] sm:$0xf]
  %v29 = vld [vmem:[%s0 + $0x30] sm:$0xf]
  %v30 = vld [vmem:[%s0 + $0x34] sm:$0xf]
  %v31 = vld [vmem:[%s0 + $0x38] sm:$0xf]
  %v32 = vld [vmem:[%s0 + $0x3c] sm:$0xf]
  %v33 = vld [vmem:[%s1] sm:$0xf]
  %v34 = vld [vmem:[%s1 + $0x4] sm:$0xf]
  %v35 = vld [vmem:[%s1 + $0x8] sm:$0xf]
  %v36 = vld [vmem:[%s1 + $0xc] sm:$0xf]
  %v37 = vld [vmem:[%s1 + $0x10] sm:$0xf]
  %v38 = vld [vmem:[%s1 + $0x14] sm:$0xf]
  %v39 = vld [vmem:[%s1 + $0x18] sm:$0xf]
  %v40 = vld [vmem:[%s1 + $0x1c] sm:$0xf]
  %v41 = vld [vmem:[%s1 + $0x20] sm:$0xf]
  %v42 = vld [vmem:[%s1 + $0x24] sm:$0xf]
  %v43 = vld [vmem:[%s1 + $0x28] sm:$0xf]
  %v44 = vld [vmem:[%s1 + $0x2c] sm:$0xf]
  %v45 = vld [vmem:[%s1 + $0x30] sm:$0xf]
  %v46 = vld [vmem:[%s1 + $0x34] sm:$0xf]
  %v47 = vld [vmem:[%s1 + $0x38] sm:$0xf]
  %v48 = vld [vmem:[%s1 + $0x3c] sm:$0xf]
  %v65 = vunpack.c.l.b16 %v17
  %v66 = vunpack.c.l.b16 %v18
  %v67 = vunpack.c.l.b16 %v19
  %v68 = vunpack.c.l.b16 %v20
  %v69 = vunpack.c.l.b16 %v21
  %v70 = vunpack.c.l.b16 %v22
  %v71 = vunpack.c.l.b16 %v23
  %v72 = vunpack.c.l.b16 %v24
  %v73 = vunpack.c.l.b16 %v25
  %v74 = vunpack.c.l.b16 %v26
  %v75 = vunpack.c.l.b16 %v27
  %v76 = vunpack.c.l.b16 %v28
  %v77 = vunpack.c.l.b16 %v29
  %v78 = vunpack.c.l.b16 %v30
  %v79 = vunpack.c.l.b16 %v31
  %v80 = vunpack.c.l.b16 %v32
  %v81 = vpack.c.b16 %v66, %v65
  %v82 = vpack.c.b16 %v68, %v67
  %v83 = vpack.c.b16 %v70, %v69
  %v84 = vpack.c.b16 %v72, %v71
  %v85 = vpack.c.b16 %v74, %v73
  %v86 = vpack.c.b16 %v76, %v75
  %v87 = vpack.c.b16 %v78, %v77
  %v88 = vpack.c.b16 %v80, %v79
  %v113 = vunpack.c.l.b16 %v33
  %v114 = vunpack.c.l.b16 %v34
  %v115 = vunpack.c.l.b16 %v35
  %v116 = vunpack.c.l.b16 %v36
  %v117 = vunpack.c.l.b16 %v37
  %v118 = vunpack.c.l.b16 %v38
  %v119 = vunpack.c.l.b16 %v39
  %v120 = vunpack.c.l.b16 %v40
  %v121 = vunpack.c.l.b16 %v41
  %v122 = vunpack.c.l.b16 %v42
  %v123 = vunpack.c.l.b16 %v43
  %v124 = vunpack.c.l.b16 %v44
  %v125 = vunpack.c.l.b16 %v45
  %v126 = vunpack.c.l.b16 %v46
  %v127 = vunpack.c.l.b16 %v47
  %v128 = vunpack.c.l.b16 %v48
  %v129 = vpack.c.b16 %v114, %v113
  %v130 = vpack.c.b16 %v116, %v115
  %v131 = vpack.c.b16 %v118, %v117
  %v132 = vpack.c.b16 %v120, %v119
  %v133 = vpack.c.b16 %v122, %v121
  %v134 = vpack.c.b16 %v124, %v123
  %v135 = vpack.c.b16 %v126, %v125
  %v136 = vpack.c.b16 %v128, %v127
  %145 = vmatpush.bf16.msra.mxu0 %v136
  %146 = vmatpush.bf16.msra.mxu0 %v135
  %147 = vmatpush.bf16.msra.mxu0 %v134
  %148 = vmatpush.bf16.msra.mxu0 %v133
  %149 = vmatpush.bf16.msra.mxu0 %v132
  %150 = vmatpush.bf16.msra.mxu0 %v131
  %151 = vmatpush.bf16.msra.mxu0 %v130
  %152 = vmatpush.bf16.msra.mxu0 %v129
  %153 = vmatmul.bf16.gmra.mxu0 %v81
  %v154 = vpop.f32.mrf.mxu0
  %v155 = vadd.f32 0.0, %v154
  %v156 = vpop.f32.mrf.mxu0
  %v157 = vadd.f32 0.0, %v156
  %158 = vmatmul.bf16.gmra.mxu0 %v82
  %v159 = vpop.f32.mrf.mxu0
  %v160 = vadd.f32 0.0, %v159
  %v161 = vpop.f32.mrf.mxu0
  %v162 = vadd.f32 0.0, %v161
  %163 = vmatmul.bf16.gmra.mxu0 %v83
  %v164 = vpop.f32.mrf.mxu0
  %v165 = vadd.f32 0.0, %v164
  %v166 = vpop.f32.mrf.mxu0
  %v167 = vadd.f32 0.0, %v166
  %168 = vmatmul.bf16.gmra.mxu0 %v84
  %v169 = vpop.f32.mrf.mxu0
  %v170 = vadd.f32 0.0, %v169
  %v171 = vpop.f32.mrf.mxu0
  %v172 = vadd.f32 0.0, %v171
  %173 = vmatmul.bf16.gmra.mxu0 %v85
  %v174 = vpop.f32.mrf.mxu0
  %v175 = vadd.f32 0.0, %v174
  %v176 = vpop.f32.mrf.mxu0
  %v177 = vadd.f32 0.0, %v176
  %178 = vmatmul.bf16.gmra.mxu0 %v86
  %v179 = vpop.f32.mrf.mxu0
  %v180 = vadd.f32 0.0, %v179
  %v181 = vpop.f32.mrf.mxu0
  %v182 = vadd.f32 0.0, %v181
  %183 = vmatmul.bf16.gmra.mxu0 %v87
  %v184 = vpop.f32.mrf.mxu0
  %v185 = vadd.f32 0.0, %v184
  %v186 = vpop.f32.mrf.mxu0
  %v187 = vadd.f32 0.0, %v186
  %188 = vmatmul.bf16.gmra.mxu0 %v88
  %v189 = vpop.f32.mrf.mxu0
  %v190 = vadd.f32 0.0, %v189
  %v191 = vpop.f32.mrf.mxu0
  %v192 = vadd.f32 0.0, %v191
  %193 = vdwg.mxu0
  %v194 = vld [vmem:[%s2] sm:$0x1]
  %v196 = vperm.slane %v194, 0
  %v198 = vmul.f32 %v155, %v196
  %v199 = vmul.f32 %v157, %v196
  %v200 = vmul.f32 %v160, %v196
  %v201 = vmul.f32 %v162, %v196
  %v202 = vmul.f32 %v165, %v196
  %v203 = vmul.f32 %v167, %v196
  %v204 = vmul.f32 %v170, %v196
  %v205 = vmul.f32 %v172, %v196
  %v206 = vmul.f32 %v175, %v196
  %v207 = vmul.f32 %v177, %v196
  %v208 = vmul.f32 %v180, %v196
  %v209 = vmul.f32 %v182, %v196
  %v210 = vmul.f32 %v185, %v196
  %v211 = vmul.f32 %v187, %v196
  %v212 = vmul.f32 %v190, %v196
  %v213 = vmul.f32 %v192, %v196
  %v214 = vld [vmem:[%s3] sm:$0x1]
  %v216 = vperm.slane %v214, 0
  %v218 = vadd.f32 %v198, %v216
  %v219 = vadd.f32 %v199, %v216
  %v220 = vadd.f32 %v200, %v216
  %v221 = vadd.f32 %v201, %v216
  %v222 = vadd.f32 %v202, %v216
  %v223 = vadd.f32 %v203, %v216
  %v224 = vadd.f32 %v204, %v216
  %v225 = vadd.f32 %v205, %v216
  %v226 = vadd.f32 %v206, %v216
  %v227 = vadd.f32 %v207, %v216
  %v228 = vadd.f32 %v208, %v216
  %v229 = vadd.f32 %v209, %v216
  %v230 = vadd.f32 %v210, %v216
  %v231 = vadd.f32 %v211, %v216
  %v232 = vadd.f32 %v212, %v216
  %v233 = vadd.f32 %v213, %v216
  %vm234 = vcmp.ge.f32.partialorder %v218, 0.0
  %vm235 = vcmp.ge.f32.partialorder %v219, 0.0
  %vm236 = vcmp.ge.f32.partialorder %v220, 0.0
  %vm237 = vcmp.ge.f32.partialorder %v221, 0.0
  %vm238 = vcmp.ge.f32.partialorder %v222, 0.0
  %vm239 = vcmp.ge.f32.partialorder %v223, 0.0
  %vm240 = vcmp.ge.f32.partialorder %v224, 0.0
  %vm241 = vcmp.ge.f32.partialorder %v225, 0.0
  %vm242 = vcmp.ge.f32.partialorder %v226, 0.0
  %vm243 = vcmp.ge.f32.partialorder %v227, 0.0
  %vm244 = vcmp.ge.f32.partialorder %v228, 0.0
  %vm245 = vcmp.ge.f32.partialorder %v229, 0.0
  %vm246 = vcmp.ge.f32.partialorder %v230, 0.0
  %vm247 = vcmp.ge.f32.partialorder %v231, 0.0
  %vm248 = vcmp.ge.f32.partialorder %v232, 0.0
  %vm249 = vcmp.ge.f32.partialorder %v233, 0.0
  %v250 = vmul.f32 %v218, 0.2
  %v251 = vmul.f32 %v219, 0.2
  %v252 = vmul.f32 %v220, 0.2
  %v253 = vmul.f32 %v221, 0.2
  %v254 = vmul.f32 %v222, 0.2
  %v255 = vmul.f32 %v223, 0.2
  %v256 = vmul.f32 %v224, 0.2
  %v257 = vmul.f32 %v225, 0.2
  %v258 = vmul.f32 %v226, 0.2
  %v259 = vmul.f32 %v227, 0.2
  %v260 = vmul.f32 %v228, 0.2
  %v261 = vmul.f32 %v229, 0.2
  %v262 = vmul.f32 %v230, 0.2
  %v263 = vmul.f32 %v231, 0.2
  %v264 = vmul.f32 %v232, 0.2
  %v265 = vmul.f32 %v233, 0.2
  %v266 = vsel %vm234, %v218, %v250
  %v267 = vsel %vm235, %v219, %v251
  %v268 = vsel %vm236, %v220, %v252
  %v269 = vsel %vm237, %v221, %v253
  %v270 = vsel %vm238, %v222, %v254
  %v271 = vsel %vm239, %v223, %v255
  %v272 = vsel %vm240, %v224, %v256
  %v273 = vsel %vm241, %v225, %v257
  %v274 = vsel %vm242, %v226, %v258
  %v275 = vsel %vm243, %v227, %v259
  %v276 = vsel %vm244, %v228, %v260
  %v277 = vsel %vm245, %v229, %v261
  %v278 = vsel %vm246, %v230, %v262
  %v279 = vsel %vm247, %v231, %v263
  %v280 = vsel %vm248, %v232, %v264
  %v281 = vsel %vm249, %v233, %v265
  %v282 = vpack.c.bf16 %v266, %v266
  %v283 = vpack.c.bf16 %v267, %v267
  %v284 = vpack.c.bf16 %v268, %v268
  %v285 = vpack.c.bf16 %v269, %v269
  %v286 = vpack.c.bf16 %v270, %v270
  %v287 = vpack.c.bf16 %v271, %v271
  %v288 = vpack.c.bf16 %v272, %v272
  %v289 = vpack.c.bf16 %v273, %v273
  %v290 = vpack.c.bf16 %v274, %v274
  %v291 = vpack.c.bf16 %v275, %v275
  %v292 = vpack.c.bf16 %v276, %v276
  %v293 = vpack.c.bf16 %v277, %v277
  %v294 = vpack.c.bf16 %v278, %v278
  %v295 = vpack.c.bf16 %v279, %v279
  %v296 = vpack.c.bf16 %v280, %v280
  %v297 = vpack.c.bf16 %v281, %v281
  %vm298 = vcmask 125952
  %299 = vst.msk [vmem:[%s4] sm:$0xf] %vm298, %v282
  %300 = vst.msk [vmem:[%s4 + $0x4] sm:$0xf] %vm298, %v283
  %301 = vst.msk [vmem:[%s4 + $0x8] sm:$0xf] %vm298, %v284
  %302 = vst.msk [vmem:[%s4 + $0xc] sm:$0xf] %vm298, %v285
  %303 = vst.msk [vmem:[%s4 + $0x10] sm:$0xf] %vm298, %v286
  %304 = vst.msk [vmem:[%s4 + $0x14] sm:$0xf] %vm298, %v287
  %305 = vst.msk [vmem:[%s4 + $0x18] sm:$0xf] %vm298, %v288
  %306 = vst.msk [vmem:[%s4 + $0x1c] sm:$0xf] %vm298, %v289
  %307 = vst.msk [vmem:[%s4 + $0x20] sm:$0xf] %vm298, %v290
  %308 = vst.msk [vmem:[%s4 + $0x24] sm:$0xf] %vm298, %v291
  %309 = vst.msk [vmem:[%s4 + $0x28] sm:$0xf] %vm298, %v292
  %310 = vst.msk [vmem:[%s4 + $0x2c] sm:$0xf] %vm298, %v293
  %311 = vst.msk [vmem:[%s4 + $0x30] sm:$0xf] %vm298, %v294
  %312 = vst.msk [vmem:[%s4 + $0x34] sm:$0xf] %vm298, %v295
  %313 = vst.msk [vmem:[%s4 + $0x38] sm:$0xf] %vm298, %v296
  %314 = vst.msk [vmem:[%s4 + $0x3c] sm:$0xf] %vm298, %v297
  // Predicated region
  $region18: #{_lambda_.6} parent=0 // pred_check
    _
  $region19: #{_lambda_.6} parent=0 // pred_check_branch
    %316 = sbr.rel (0) target = $region21
  $region20: #{_lambda_.6} parent=0 // pred_region
    _
  $region21: #{_lambda_.6} parent=0 // pred_fallthru
    _
  // Predicated region
  $region22: #{_lambda_.6} parent=0 // pred_check
    _
  $region23: #{_lambda_.6} parent=0 // pred_check_branch
    %318 = sbr.rel (0) target = $region25
  $region24: #{_lambda_.6} parent=0 // pred_region
    _
  $region25: #{_lambda_.6} parent=0 // pred_fallthru
    _

// kernel: _lambda_.7
$region0: #{_lambda_.7}
  #allocation0 [shape = 'u32[]', space=smem, size = 0x4, offset = 0x4, fixed_abs, tag = 'smem constant byte address 0x4 - core index']
  #allocation1 [shape = 'u32[72,128]{1,0:T(1,128)}', space=vmem, size = 0x9000, scoped, tag = 'internal scratch']
  %s0 = inlined_call_operand.vmem [shape: bf16[32,256], index: 0, kind: input, shape index: {}]
  %s1 = inlined_call_operand.vmem [shape: bf16[256,32], index: 1, kind: input, shape index: {}]
  %s2 = inlined_call_operand.vmem [shape: f32[1,32], index: 2, kind: input, shape index: {}]
  %s3 = inlined_call_operand.vmem [shape: f32[1,32], index: 3, kind: input, shape index: {}]
  %s4 = inlined_call_operand.vmem [shape: bf16[32,32], index: 4, kind: output, shape index: {}]
  %s5 = sld [smem:[#allocation0]]
  $region26: #{_lambda_.7} parent=0
    _
  %s7 = ssub.s32 1, %s5
  %s8 = scalar_select 0, %s7, %s5
  // Predicated region
  $region2: #{_lambda_.7} parent=0 // pred_check
    _
  $region3: #{_lambda_.7} parent=0 // pred_check_branch
    %10 = sbr.rel (0) target = $region5
  $region4: #{_lambda_.7} parent=0 // pred_region
    _
  $region5: #{_lambda_.7} parent=0 // pred_fallthru
    _
  // Predicated region
  $region6: #{_lambda_.7} parent=0 // pred_check
    _
  $region7: #{_lambda_.7} parent=0 // pred_check_branch
    %12 = sbr.rel (0) target = $region9
  $region8: #{_lambda_.7} parent=0 // pred_region
    _
  $region9: #{_lambda_.7} parent=0 // pred_fallthru
    _
  // Predicated region
  $region10: #{_lambda_.7} parent=0 // pred_check
    _
  $region11: #{_lambda_.7} parent=0 // pred_check_branch
    %14 = sbr.rel (0) target = $region13
  $region12: #{_lambda_.7} parent=0 // pred_region
    _
  $region13: #{_lambda_.7} parent=0 // pred_fallthru
    _
  // Predicated region
  $region14: #{_lambda_.7} parent=0 // pred_check
    _
  $region15: #{_lambda_.7} parent=0 // pred_check_branch
    %16 = sbr.rel (0) target = $region17
  $region16: #{_lambda_.7} parent=0 // pred_region
    _
  $region17: #{_lambda_.7} parent=0 // pred_fallthru
    _
  %v17 = vld [vmem:[%s0] sm:$0xff]
  %v18 = vld [vmem:[%s0 + $0x8] sm:$0xff]
  %v19 = vld [vmem:[%s0 + $0x10] sm:$0xff]
  %v20 = vld [vmem:[%s0 + $0x18] sm:$0xff]
  %v21 = vld [vmem:[%s1] sm:$0xf]
  %v22 = vld [vmem:[%s1 + $0x4] sm:$0xf]
  %v23 = vld [vmem:[%s1 + $0x8] sm:$0xf]
  %v24 = vld [vmem:[%s1 + $0xc] sm:$0xf]
  %v25 = vld [vmem:[%s1 + $0x10] sm:$0xf]
  %v26 = vld [vmem:[%s1 + $0x14] sm:$0xf]
  %v27 = vld [vmem:[%s1 + $0x18] sm:$0xf]
  %v28 = vld [vmem:[%s1 + $0x1c] sm:$0xf]
  %v29 = vld [vmem:[%s1 + $0x20] sm:$0xf]
  %v30 = vld [vmem:[%s1 + $0x24] sm:$0xf]
  %v31 = vld [vmem:[%s1 + $0x28] sm:$0xf]
  %v32 = vld [vmem:[%s1 + $0x2c] sm:$0xf]
  %v33 = vld [vmem:[%s1 + $0x30] sm:$0xf]
  %v34 = vld [vmem:[%s1 + $0x34] sm:$0xf]
  %v35 = vld [vmem:[%s1 + $0x38] sm:$0xf]
  %v36 = vld [vmem:[%s1 + $0x3c] sm:$0xf]
  %v37 = vld [vmem:[%s1 + $0x40] sm:$0xf]
  %v38 = vld [vmem:[%s1 + $0x44] sm:$0xf]
  %v39 = vld [vmem:[%s1 + $0x48] sm:$0xf]
  %v40 = vld [vmem:[%s1 + $0x4c] sm:$0xf]
  %v41 = vld [vmem:[%s1 + $0x50] sm:$0xf]
  %v42 = vld [vmem:[%s1 + $0x54] sm:$0xf]
  %v43 = vld [vmem:[%s1 + $0x58] sm:$0xf]
  %v44 = vld [vmem:[%s1 + $0x5c] sm:$0xf]
  %v45 = vld [vmem:[%s1 + $0x60] sm:$0xf]
  %v46 = vld [vmem:[%s1 + $0x64] sm:$0xf]
  %v47 = vld [vmem:[%s1 + $0x68] sm:$0xf]
  %v48 = vld [vmem:[%s1 + $0x6c] sm:$0xf]
  %v49 = vld [vmem:[%s1 + $0x70] sm:$0xf]
  %v50 = vld [vmem:[%s1 + $0x74] sm:$0xf]
  %v51 = vld [vmem:[%s1 + $0x78] sm:$0xf]
  %v52 = vld [vmem:[%s1 + $0x7c] sm:$0xf]
  %v57 = vunpack.c.l.b16 %v17
  %v58 = vunpack.c.h.b16 %v17
  %v59 = vunpack.c.l.b16 %v18
  %v60 = vunpack.c.h.b16 %v18
  %v61 = vunpack.c.l.b16 %v19
  %v62 = vunpack.c.h.b16 %v19
  %v63 = vunpack.c.l.b16 %v20
  %v64 = vunpack.c.h.b16 %v20
  %v65 = vpack.c.b16 %v59, %v57
  %v66 = vpack.c.b16 %v60, %v58
  %v67 = vpack.c.b16 %v63, %v61
  %v68 = vpack.c.b16 %v64, %v62
  %v105 = vunpack.c.l.b16 %v21
  %v106 = vunpack.c.l.b16 %v22
  %v107 = vunpack.c.l.b16 %v23
  %v108 = vunpack.c.l.b16 %v24
  %v109 = vunpack.c.l.b16 %v25
  %v110 = vunpack.c.l.b16 %v26
  %v111 = vunpack.c.l.b16 %v27
  %v112 = vunpack.c.l.b16 %v28
  %v113 = vunpack.c.l.b16 %v29
  %v114 = vunpack.c.l.b16 %v30
  %v115 = vunpack.c.l.b16 %v31
  %v116 = vunpack.c.l.b16 %v32
  %v117 = vunpack.c.l.b16 %v33
  %v118 = vunpack.c.l.b16 %v34
  %v119 = vunpack.c.l.b16 %v35
  %v120 = vunpack.c.l.b16 %v36
  %v121 = vunpack.c.l.b16 %v37
  %v122 = vunpack.c.l.b16 %v38
  %v123 = vunpack.c.l.b16 %v39
  %v124 = vunpack.c.l.b16 %v40
  %v125 = vunpack.c.l.b16 %v41
  %v126 = vunpack.c.l.b16 %v42
  %v127 = vunpack.c.l.b16 %v43
  %v128 = vunpack.c.l.b16 %v44
  %v129 = vunpack.c.l.b16 %v45
  %v130 = vunpack.c.l.b16 %v46
  %v131 = vunpack.c.l.b16 %v47
  %v132 = vunpack.c.l.b16 %v48
  %v133 = vunpack.c.l.b16 %v49
  %v134 = vunpack.c.l.b16 %v50
  %v135 = vunpack.c.l.b16 %v51
  %v136 = vunpack.c.l.b16 %v52
  %v137 = vpack.c.b16 %v106, %v105
  %v138 = vpack.c.b16 %v108, %v107
  %v139 = vpack.c.b16 %v110, %v109
  %v140 = vpack.c.b16 %v112, %v111
  %v141 = vpack.c.b16 %v114, %v113
  %v142 = vpack.c.b16 %v116, %v115
  %v143 = vpack.c.b16 %v118, %v117
  %v144 = vpack.c.b16 %v120, %v119
  %v145 = vpack.c.b16 %v122, %v121
  %v146 = vpack.c.b16 %v124, %v123
  %v147 = vpack.c.b16 %v126, %v125
  %v148 = vpack.c.b16 %v128, %v127
  %v149 = vpack.c.b16 %v130, %v129
  %v150 = vpack.c.b16 %v132, %v131
  %v151 = vpack.c.b16 %v134, %v133
  %v152 = vpack.c.b16 %v136, %v135
  %169 = vmatpush.bf16.msra.mxu0 %v144
  %170 = vmatpush.bf16.msra.mxu0 %v143
  %171 = vmatpush.bf16.msra.mxu0 %v142
  %172 = vmatpush.bf16.msra.mxu0 %v141
  %173 = vmatpush.bf16.msra.mxu0 %v140
  %174 = vmatpush.bf16.msra.mxu0 %v139
  %175 = vmatpush.bf16.msra.mxu0 %v138
  %176 = vmatpush.bf16.msra.mxu0 %v137
  %177 = vmatmul.bf16.gmra.mxu0 %v65
  %v178 = vpop.f32.mrf.mxu0
  %v179 = vadd.f32 0.0, %v178
  %v180 = vpop.f32.mrf.mxu0
  %v181 = vadd.f32 0.0, %v180
  %182 = vmatmul.bf16.gmra.mxu0 %v67
  %v183 = vpop.f32.mrf.mxu0
  %v184 = vadd.f32 0.0, %v183
  %v185 = vpop.f32.mrf.mxu0
  %v186 = vadd.f32 0.0, %v185
  %187 = vdwg.mxu0
  %188 = vmatpush.bf16.msra.mxu0 %v152
  %189 = vmatpush.bf16.msra.mxu0 %v151
  %190 = vmatpush.bf16.msra.mxu0 %v150
  %191 = vmatpush.bf16.msra.mxu0 %v149
  %192 = vmatpush.bf16.msra.mxu0 %v148
  %193 = vmatpush.bf16.msra.mxu0 %v147
  %194 = vmatpush.bf16.msra.mxu0 %v146
  %195 = vmatpush.bf16.msra.mxu0 %v145
  %196 = vmatmul.bf16.gmra.mxu0 %v66
  %v197 = vpop.f32.mrf.mxu0
  %v198 = vadd.f32 %v179, %v197
  %v199 = vpop.f32.mrf.mxu0
  %v200 = vadd.f32 %v181, %v199
  %201 = vmatmul.bf16.gmra.mxu0 %v68
  %v202 = vpop.f32.mrf.mxu0
  %v203 = vadd.f32 %v184, %v202
  %v204 = vpop.f32.mrf.mxu0
  %v205 = vadd.f32 %v186, %v204
  %206 = vdwg.mxu0
  %v207 = vld [vmem:[%s2] sm:$0x1]
  %v209 = vperm.slane %v207, 0
  %v211 = vmul.f32 %v198, %v209
  %v212 = vmul.f32 %v200, %v209
  %v213 = vmul.f32 %v203, %v209
  %v214 = vmul.f32 %v205, %v209
  %v215 = vld [vmem:[%s3] sm:$0x1]
  %v217 = vperm.slane %v215, 0
  %v219 = vadd.f32 %v211, %v217
  %v220 = vadd.f32 %v212, %v217
  %v221 = vadd.f32 %v213, %v217
  %v222 = vadd.f32 %v214, %v217
  %vm223 = vcmp.ge.f32.partialorder %v219, 0.0
  %vm224 = vcmp.ge.f32.partialorder %v220, 0.0
  %vm225 = vcmp.ge.f32.partialorder %v221, 0.0
  %vm226 = vcmp.ge.f32.partialorder %v222, 0.0
  %v227 = vmul.f32 %v219, 0.2
  %v228 = vmul.f32 %v220, 0.2
  %v229 = vmul.f32 %v221, 0.2
  %v230 = vmul.f32 %v222, 0.2
  %v231 = vsel %vm223, %v219, %v227
  %v232 = vsel %vm224, %v220, %v228
  %v233 = vsel %vm225, %v221, %v229
  %v234 = vsel %vm226, %v222, %v230
  %v235 = vpack.c.bf16 %v231, %v231
  %v236 = vpack.c.bf16 %v232, %v232
  %v237 = vpack.c.bf16 %v233, %v233
  %v238 = vpack.c.bf16 %v234, %v234
  %vm239 = vcmask 257024
  %240 = vst.msk [vmem:[%s4] sm:$0xf] %vm239, %v235
  %241 = vst.msk [vmem:[%s4 + $0x4] sm:$0xf] %vm239, %v236
  %242 = vst.msk [vmem:[%s4 + $0x8] sm:$0xf] %vm239, %v237
  %243 = vst.msk [vmem:[%s4 + $0xc] sm:$0xf] %vm239, %v238
  // Predicated region
  $region18: #{_lambda_.7} parent=0 // pred_check
    _
  $region19: #{_lambda_.7} parent=0 // pred_check_branch
    %245 = sbr.rel (0) target = $region21
  $region20: #{_lambda_.7} parent=0 // pred_region
    _
  $region21: #{_lambda_.7} parent=0 // pred_fallthru
    _
  // Predicated region
  $region22: #{_lambda_.7} parent=0 // pred_check
    _
  $region23: #{_lambda_.7} parent=0 // pred_check_branch
    %247 = sbr.rel (0) target = $region25
  $region24: #{_lambda_.7} parent=0 // pred_region
    _
  $region25: #{_lambda_.7} parent=0 // pred_fallthru
    _

// kernel: _lambda_.8
$region0: #{_lambda_.8}
  #allocation0 [shape = 'u32[]', space=smem, size = 0x4, offset = 0x4, fixed_abs, tag = 'smem constant byte address 0x4 - core index']
  #allocation1 [shape = 'u32[72,128]{1,0:T(1,128)}', space=vmem, size = 0x9000, scoped, tag = 'internal scratch']
  %s0 = inlined_call_operand.vmem [shape: bf16[18,512], index: 0, kind: input, shape index: {}]
  %s1 = inlined_call_operand.vmem [shape: bf16[512,64], index: 1, kind: input, shape index: {}]
  %s2 = inlined_call_operand.vmem [shape: f32[1,64], index: 2, kind: input, shape index: {}]
  %s3 = inlined_call_operand.vmem [shape: f32[1,64], index: 3, kind: input, shape index: {}]
  %s4 = inlined_call_operand.vmem [shape: bf16[18,64], index: 4, kind: output, shape index: {}]
  %s5 = sld [smem:[#allocation0]]
  $region26: #{_lambda_.8} parent=0
    _
  %s7 = ssub.s32 1, %s5
  %s8 = scalar_select 0, %s7, %s5
  // Predicated region
  $region2: #{_lambda_.8} parent=0 // pred_check
    _
  $region3: #{_lambda_.8} parent=0 // pred_check_branch
    %10 = sbr.rel (0) target = $region5
  $region4: #{_lambda_.8} parent=0 // pred_region
    _
  $region5: #{_lambda_.8} parent=0 // pred_fallthru
    _
  // Predicated region
  $region6: #{_lambda_.8} parent=0 // pred_check
    _
  $region7: #{_lambda_.8} parent=0 // pred_check_branch
    %12 = sbr.rel (0) target = $region9
  $region8: #{_lambda_.8} parent=0 // pred_region
    _
  $region9: #{_lambda_.8} parent=0 // pred_fallthru
    _
  // Predicated region
  $region10: #{_lambda_.8} parent=0 // pred_check
    _
  $region11: #{_lambda_.8} parent=0 // pred_check_branch
    %14 = sbr.rel (0) target = $region13
  $region12: #{_lambda_.8} parent=0 // pred_region
    _
  $region13: #{_lambda_.8} parent=0 // pred_fallthru
    _
  // Predicated region
  $region14: #{_lambda_.8} parent=0 // pred_check
    _
  $region15: #{_lambda_.8} parent=0 // pred_check_branch
    %16 = sbr.rel (0) target = $region17
  $region16: #{_lambda_.8} parent=0 // pred_region
    _
  $region17: #{_lambda_.8} parent=0 // pred_fallthru
    _
  %v17 = vld [vmem:[%s0] sm:$0xff]
  %v18 = vld [vmem:[%s0 + $0x8] sm:$0xff]
  %v19 = vld [vmem:[%s0 + $0x10] sm:$0xff]
  %v20 = vld [vmem:[%s0 + $0x18] sm:$0xff]
  %v21 = vld [vmem:[%s0 + $0x20] sm:$0x11]
  %v22 = vld [vmem:[%s0 + $0x28] sm:$0x11]
  %v23 = vld [vmem:[%s1] sm:$0xf]
  %v24 = vld [vmem:[%s1 + $0x4] sm:$0xf]
  %v25 = vld [vmem:[%s1 + $0x8] sm:$0xf]
  %v26 = vld [vmem:[%s1 + $0xc] sm:$0xf]
  %v27 = vld [vmem:[%s1 + $0x10] sm:$0xf]
  %v28 = vld [vmem:[%s1 + $0x14] sm:$0xf]
  %v29 = vld [vmem:[%s1 + $0x18] sm:$0xf]
  %v30 = vld [vmem:[%s1 + $0x1c] sm:$0xf]
  %v31 = vld [vmem:[%s1 + $0x20] sm:$0xf]
  %v32 = vld [vmem:[%s1 + $0x24] sm:$0xf]
  %v33 = vld [vmem:[%s1 + $0x28] sm:$0xf]
  %v34 = vld [vmem:[%s1 + $0x2c] sm:$0xf]
  %v35 = vld [vmem:[%s1 + $0x30] sm:$0xf]
  %v36 = vld [vmem:[%s1 + $0x34] sm:$0xf]
  %v37 = vld [vmem:[%s1 + $0x38] sm:$0xf]
  %v38 = vld [vmem:[%s1 + $0x3c] sm:$0xf]
  %v39 = vld [vmem:[%s1 + $0x40] sm:$0xf]
  %v40 = vld [vmem:[%s1 + $0x44] sm:$0xf]
  %v41 = vld [vmem:[%s1 + $0x48] sm:$0xf]
  %v42 = vld [vmem:[%s1 + $0x4c] sm:$0xf]
  %v43 = vld [vmem:[%s1 + $0x50] sm:$0xf]
  %v44 = vld [vmem:[%s1 + $0x54] sm:$0xf]
  %v45 = vld [vmem:[%s1 + $0x58] sm:$0xf]
  %v46 = vld [vmem:[%s1 + $0x5c] sm:$0xf]
  %v47 = vld [vmem:[%s1 + $0x60] sm:$0xf]
  %v48 = vld [vmem:[%s1 + $0x64] sm:$0xf]
  %v49 = vld [vmem:[%s1 + $0x68] sm:$0xf]
  %v50 = vld [vmem:[%s1 + $0x6c] sm:$0xf]
  %v51 = vld [vmem:[%s1 + $0x70] sm:$0xf]
  %v52 = vld [vmem:[%s1 + $0x74] sm:$0xf]
  %v53 = vld [vmem:[%s1 + $0x78] sm:$0xf]
  %v54 = vld [vmem:[%s1 + $0x7c] sm:$0xf]
  %v55 = vld [vmem:[%s1 + $0x80] sm:$0xf]
  %v56 = vld [vmem:[%s1 + $0x84] sm:$0xf]
  %v57 = vld [vmem:[%s1 + $0x88] sm:$0xf]
  %v58 = vld [vmem:[%s1 + $0x8c] sm:$0xf]
  %v59 = vld [vmem:[%s1 + $0x90] sm:$0xf]
  %v60 = vld [vmem:[%s1 + $0x94] sm:$0xf]
  %v61 = vld [vmem:[%s1 + $0x98] sm:$0xf]
  %v62 = vld [vmem:[%s1 + $0x9c] sm:$0xf]
  %v63 = vld [vmem:[%s1 + $0xa0] sm:$0xf]
  %v64 = vld [vmem:[%s1 + $0xa4] sm:$0xf]
  %v65 = vld [vmem:[%s1 + $0xa8] sm:$0xf]
  %v66 = vld [vmem:[%s1 + $0xac] sm:$0xf]
  %v67 = vld [vmem:[%s1 + $0xb0] sm:$0xf]
  %v68 = vld [vmem:[%s1 + $0xb4] sm:$0xf]
  %v69 = vld [vmem:[%s1 + $0xb8] sm:$0xf]
  %v70 = vld [vmem:[%s1 + $0xbc] sm:$0xf]
  %v71 = vld [vmem:[%s1 + $0xc0] sm:$0xf]
  %v72 = vld [vmem:[%s1 + $0xc4] sm:$0xf]
  %v73 = vld [vmem:[%s1 + $0xc8] sm:$0xf]
  %v74 = vld [vmem:[%s1 + $0xcc] sm:$0xf]
  %v75 = vld [vmem:[%s1 + $0xd0] sm:$0xf]
  %v76 = vld [vmem:[%s1 + $0xd4] sm:$0xf]
  %v77 = vld [vmem:[%s1 + $0xd8] sm:$0xf]
  %v78 = vld [vmem:[%s1 + $0xdc] sm:$0xf]
  %v79 = vld [vmem:[%s1 + $0xe0] sm:$0xf]
  %v80 = vld [vmem:[%s1 + $0xe4] sm:$0xf]
  %v81 = vld [vmem:[%s1 + $0xe8] sm:$0xf]
  %v82 = vld [vmem:[%s1 + $0xec] sm:$0xf]
  %v83 = vld [vmem:[%s1 + $0xf0] sm:$0xf]
  %v84 = vld [vmem:[%s1 + $0xf4] sm:$0xf]
  %v85 = vld [vmem:[%s1 + $0xf8] sm:$0xf]
  %v86 = vld [vmem:[%s1 + $0xfc] sm:$0xf]
  %v93 = vunpack.c.l.b16 %v17
  %v94 = vunpack.c.h.b16 %v17
  %v95 = vunpack.c.l.b16 %v18
  %v96 = vunpack.c.h.b16 %v18
  %v97 = vunpack.c.l.b16 %v19
  %v98 = vunpack.c.h.b16 %v19
  %v99 = vunpack.c.l.b16 %v20
  %v100 = vunpack.c.h.b16 %v20
  %v101 = vunpack.c.l.b16 %v21
  %v102 = vunpack.c.h.b16 %v21
  %v103 = vunpack.c.l.b16 %v22
  %v104 = vunpack.c.h.b16 %v22
  %v105 = vpack.c.b16 %v97, %v93
  %v106 = vpack.c.b16 %v98, %v94
  %v107 = vpack.c.b16 %v99, %v95
  %v108 = vpack.c.b16 %v100, %v96
  %v109 = vpack.c.b16 %v101, %v101
  %v110 = vpack.c.b16 %v102, %v102
  %v111 = vpack.c.b16 %v103, %v103
  %v112 = vpack.c.b16 %v104, %v104
  %v185 = vunpack.c.l.b16 %v23
  %v186 = vunpack.c.l.b16 %v24
  %v187 = vunpack.c.l.b16 %v25
  %v188 = vunpack.c.l.b16 %v26
  %v189 = vunpack.c.l.b16 %v27
  %v190 = vunpack.c.l.b16 %v28
  %v191 = vunpack.c.l.b16 %v29
  %v192 = vunpack.c.l.b16 %v30
  %v193 = vunpack.c.l.b16 %v31
  %v194 = vunpack.c.l.b16 %v32
  %v195 = vunpack.c.l.b16 %v33
  %v196 = vunpack.c.l.b16 %v34
  %v197 = vunpack.c.l.b16 %v35
  %v198 = vunpack.c.l.b16 %v36
  %v199 = vunpack.c.l.b16 %v37
  %v200 = vunpack.c.l.b16 %v38
  %v201 = vunpack.c.l.b16 %v39
  %v202 = vunpack.c.l.b16 %v40
  %v203 = vunpack.c.l.b16 %v41
  %v204 = vunpack.c.l.b16 %v42
  %v205 = vunpack.c.l.b16 %v43
  %v206 = vunpack.c.l.b16 %v44
  %v207 = vunpack.c.l.b16 %v45
  %v208 = vunpack.c.l.b16 %v46
  %v209 = vunpack.c.l.b16 %v47
  %v210 = vunpack.c.l.b16 %v48
  %v211 = vunpack.c.l.b16 %v49
  %v212 = vunpack.c.l.b16 %v50
  %v213 = vunpack.c.l.b16 %v51
  %v214 = vunpack.c.l.b16 %v52
  %v215 = vunpack.c.l.b16 %v53
  %v216 = vunpack.c.l.b16 %v54
  %v217 = vunpack.c.l.b16 %v55
  %v218 = vunpack.c.l.b16 %v56
  %v219 = vunpack.c.l.b16 %v57
  %v220 = vunpack.c.l.b16 %v58
  %v221 = vunpack.c.l.b16 %v59
  %v222 = vunpack.c.l.b16 %v60
  %v223 = vunpack.c.l.b16 %v61
  %v224 = vunpack.c.l.b16 %v62
  %v225 = vunpack.c.l.b16 %v63
  %v226 = vunpack.c.l.b16 %v64
  %v227 = vunpack.c.l.b16 %v65
  %v228 = vunpack.c.l.b16 %v66
  %v229 = vunpack.c.l.b16 %v67
  %v230 = vunpack.c.l.b16 %v68
  %v231 = vunpack.c.l.b16 %v69
  %v232 = vunpack.c.l.b16 %v70
  %v233 = vunpack.c.l.b16 %v71
  %v234 = vunpack.c.l.b16 %v72
  %v235 = vunpack.c.l.b16 %v73
  %v236 = vunpack.c.l.b16 %v74
  %v237 = vunpack.c.l.b16 %v75
  %v238 = vunpack.c.l.b16 %v76
  %v239 = vunpack.c.l.b16 %v77
  %v240 = vunpack.c.l.b16 %v78
  %v241 = vunpack.c.l.b16 %v79
  %v242 = vunpack.c.l.b16 %v80
  %v243 = vunpack.c.l.b16 %v81
  %v244 = vunpack.c.l.b16 %v82
  %v245 = vunpack.c.l.b16 %v83
  %v246 = vunpack.c.l.b16 %v84
  %v247 = vunpack.c.l.b16 %v85
  %v248 = vunpack.c.l.b16 %v86
  %v249 = vpack.c.b16 %v186, %v185
  %v250 = vpack.c.b16 %v188, %v187
  %v251 = vpack.c.b16 %v190, %v189
  %v252 = vpack.c.b16 %v192, %v191
  %v253 = vpack.c.b16 %v194, %v193
  %v254 = vpack.c.b16 %v196, %v195
  %v255 = vpack.c.b16 %v198, %v197
  %v256 = vpack.c.b16 %v200, %v199
  %v257 = vpack.c.b16 %v202, %v201
  %v258 = vpack.c.b16 %v204, %v203
  %v259 = vpack.c.b16 %v206, %v205
  %v260 = vpack.c.b16 %v208, %v207
  %v261 = vpack.c.b16 %v210, %v209
  %v262 = vpack.c.b16 %v212, %v211
  %v263 = vpack.c.b16 %v214, %v213
  %v264 = vpack.c.b16 %v216, %v215
  %v265 = vpack.c.b16 %v218, %v217
  %v266 = vpack.c.b16 %v220, %v219
  %v267 = vpack.c.b16 %v222, %v221
  %v268 = vpack.c.b16 %v224, %v223
  %v269 = vpack.c.b16 %v226, %v225
  %v270 = vpack.c.b16 %v228, %v227
  %v271 = vpack.c.b16 %v230, %v229
  %v272 = vpack.c.b16 %v232, %v231
  %v273 = vpack.c.b16 %v234, %v233
  %v274 = vpack.c.b16 %v236, %v235
  %v275 = vpack.c.b16 %v238, %v237
  %v276 = vpack.c.b16 %v240, %v239
  %v277 = vpack.c.b16 %v242, %v241
  %v278 = vpack.c.b16 %v244, %v243
  %v279 = vpack.c.b16 %v246, %v245
  %v280 = vpack.c.b16 %v248, %v247
  %313 = vmatpush.bf16.msra.mxu0 %v256
  %314 = vmatpush.bf16.msra.mxu0 %v255
  %315 = vmatpush.bf16.msra.mxu0 %v254
  %316 = vmatpush.bf16.msra.mxu0 %v253
  %317 = vmatpush.bf16.msra.mxu0 %v252
  %318 = vmatpush.bf16.msra.mxu0 %v251
  %319 = vmatpush.bf16.msra.mxu0 %v250
  %320 = vmatpush.bf16.msra.mxu0 %v249
  %321 = vmatmul.bf16.gmra.mxu0 %v105
  %v322 = vpop.f32.mrf.mxu0
  %v323 = vadd.f32 0.0, %v322
  %v324 = vpop.f32.mrf.mxu0
  %v325 = vadd.f32 0.0, %v324
  %326 = vmatmul.bf16.gmra.mxu0 %v109
  %v327 = vpop.f32.mrf.mxu0
  %v328 = vadd.f32 0.0, %v327
  %v329 = vpop.f32.mrf.mxu0
  %330 = vdwg.mxu0
  %331 = vmatpush.bf16.msra.mxu0 %v264
  %332 = vmatpush.bf16.msra.mxu0 %v263
  %333 = vmatpush.bf16.msra.mxu0 %v262
  %334 = vmatpush.bf16.msra.mxu0 %v261
  %335 = vmatpush.bf16.msra.mxu0 %v260
  %336 = vmatpush.bf16.msra.mxu0 %v259
  %337 = vmatpush.bf16.msra.mxu0 %v258
  %338 = vmatpush.bf16.msra.mxu0 %v257
  %339 = vmatmul.bf16.gmra.mxu0 %v106
  %v340 = vpop.f32.mrf.mxu0
  %v341 = vadd.f32 %v323, %v340
  %v342 = vpop.f32.mrf.mxu0
  %v343 = vadd.f32 %v325, %v342
  %344 = vmatmul.bf16.gmra.mxu0 %v110
  %v345 = vpop.f32.mrf.mxu0
  %v346 = vadd.f32 %v328, %v345
  %v347 = vpop.f32.mrf.mxu0
  %348 = vdwg.mxu0
  %349 = vmatpush.bf16.msra.mxu0 %v272
  %350 = vmatpush.bf16.msra.mxu0 %v271
  %351 = vmatpush.bf16.msra.mxu0 %v270
  %352 = vmatpush.bf16.msra.mxu0 %v269
  %353 = vmatpush.bf16.msra.mxu0 %v268
  %354 = vmatpush.bf16.msra.mxu0 %v267
  %355 = vmatpush.bf16.msra.mxu0 %v266
  %356 = vmatpush.bf16.msra.mxu0 %v265
  %357 = vmatmul.bf16.gmra.mxu0 %v107
  %v358 = vpop.f32.mrf.mxu0
  %v359 = vadd.f32 %v341, %v358
  %v360 = vpop.f32.mrf.mxu0
  %v361 = vadd.f32 %v343, %v360
  %362 = vmatmul.bf16.gmra.mxu0 %v111
  %v363 = vpop.f32.mrf.mxu0
  %v364 = vadd.f32 %v346, %v363
  %v365 = vpop.f32.mrf.mxu0
  %366 = vdwg.mxu0
  %367 = vmatpush.bf16.msra.mxu0 %v280
  %368 = vmatpush.bf16.msra.mxu0 %v279
  %369 = vmatpush.bf16.msra.mxu0 %v278
  %370 = vmatpush.bf16.msra.mxu0 %v277
  %371 = vmatpush.bf16.msra.mxu0 %v276
  %372 = vmatpush.bf16.msra.mxu0 %v275
  %373 = vmatpush.bf16.msra.mxu0 %v274
  %374 = vmatpush.bf16.msra.mxu0 %v273
  %375 = vmatmul.bf16.gmra.mxu0 %v108
  %v376 = vpop.f32.mrf.mxu0
  %v377 = vadd.f32 %v359, %v376
  %v378 = vpop.f32.mrf.mxu0
  %v379 = vadd.f32 %v361, %v378
  %380 = vmatmul.bf16.gmra.mxu0 %v112
  %v381 = vpop.f32.mrf.mxu0
  %v382 = vadd.f32 %v364, %v381
  %v383 = vpop.f32.mrf.mxu0
  %384 = vdwg.mxu0
  %v385 = vld [vmem:[%s2] sm:$0x1]
  %v387 = vperm.slane %v385, 0
  %v389 = vmul.f32 %v377, %v387
  %v390 = vmul.f32 %v379, %v387
  %v391 = vmul.f32 %v382, %v387
  %v392 = vld [vmem:[%s3] sm:$0x1]
  %v394 = vperm.slane %v392, 0
  %v396 = vadd.f32 %v389, %v394
  %v397 = vadd.f32 %v390, %v394
  %v398 = vadd.f32 %v391, %v394
  %vm399 = vcmp.ge.f32.partialorder %v396, 0.0
  %vm400 = vcmp.ge.f32.partialorder %v397, 0.0
  %vm401 = vcmp.ge.f32.partialorder %v398, 0.0
  %v402 = vmul.f32 %v396, 0.2
  %v403 = vmul.f32 %v397, 0.2
  %v404 = vmul.f32 %v398, 0.2
  %v405 = vsel %vm399, %v396, %v402
  %v406 = vsel %vm400, %v397, %v403
  %v407 = vsel %vm401, %v398, %v404
  %v408 = vpack.c.bf16 %v405, %v405
  %v409 = vpack.c.bf16 %v406, %v406
  %v410 = vpack.c.bf16 %v407, %v407
  %vm411 = vcmask 519168
  %412 = vst.msk [vmem:[%s4] sm:$0xf] %vm411, %v408
  %413 = vst.msk [vmem:[%s4 + $0x4] sm:$0xf] %vm411, %v409
  %vm414 = vcmask 516096
  %415 = vst.msk [vmem:[%s4 + $0x8] sm:$0x1] %vm414, %v410
  // Predicated region
  $region18: #{_lambda_.8} parent=0 // pred_check
    _
  $region19: #{_lambda_.8} parent=0 // pred_check_branch
    %417 = sbr.rel (0) target = $region21
  $region20: #{_lambda_.8} parent=0 // pred_region
    _
  $region21: #{_lambda_.8} parent=0 // pred_fallthru
    _
  // Predicated region
  $region22: #{_lambda_.8} parent=0 // pred_check
    _
  $region23: #{_lambda_.8} parent=0 // pred_check_branch
    %419 = sbr.rel (0) target = $region25
  $region24: #{_lambda_.8} parent=0 // pred_region
    _
  $region25: #{_lambda_.8} parent=0 // pred_fallthru
    _

// kernel: _lambda_.9
$region0: #{_lambda_.9}
  #allocation0 [shape = 'u32[]', space=smem, size = 0x4, offset = 0x4, fixed_abs, tag = 'smem constant byte address 0x4 - core index']
  #allocation1 [shape = 'u32[72,128]{1,0:T(1,128)}', space=vmem, size = 0x9000, scoped, tag = 'internal scratch']
  #allocation2 [shape = 'f32[1,1]{1,0:T(1,128)S(1)}', space=vmem, size = 0x200, scoped, tag = 'scoped memory for _lambda_.9']
  #allocation3 [shape = 'f32[1,1]{1,0:T(1,128)S(1)}', space=vmem, size = 0x200, scoped, tag = 'scoped memory for _lambda_.9']
  %s0 = inlined_call_operand.vmem [shape: bf16[8,1024], index: 0, kind: input, shape index: {}]
  %s1 = inlined_call_operand.vmem [shape: bf16[1024,1], index: 1, kind: input, shape index: {}]
  %s2 = inlined_call_operand.<no memory space> [shape: f32[1,1], index: 2, kind: input, shape index: {}]
  %s3 = inlined_call_operand.<no memory space> [shape: f32[1,1], index: 3, kind: input, shape index: {}]
  %s4 = inlined_call_operand.vmem [shape: f32[8,1], index: 4, kind: output, shape index: {}]
  %s5 = sld [smem:[#allocation0]]
  $region26: #{_lambda_.9} parent=0
    _
  %s7 = ssub.s32 1, %s5
  %s8 = scalar_select 0, %s7, %s5
  %v9 = vstv %s2
  %10 = vst [vmem:[#allocation2] sm:$0x1] %v9
  %v11 = vstv %s3
  %12 = vst [vmem:[#allocation3] sm:$0x1] %v11
  // Predicated region
  $region2: #{_lambda_.9} parent=0 // pred_check
    _
  $region3: #{_lambda_.9} parent=0 // pred_check_branch
    %14 = sbr.rel (0) target = $region5
  $region4: #{_lambda_.9} parent=0 // pred_region
    _
  $region5: #{_lambda_.9} parent=0 // pred_fallthru
    _
  // Predicated region
  $region6: #{_lambda_.9} parent=0 // pred_check
    _
  $region7: #{_lambda_.9} parent=0 // pred_check_branch
    %16 = sbr.rel (0) target = $region9
  $region8: #{_lambda_.9} parent=0 // pred_region
    _
  $region9: #{_lambda_.9} parent=0 // pred_fallthru
    _
  // Predicated region
  $region10: #{_lambda_.9} parent=0 // pred_check
    _
  $region11: #{_lambda_.9} parent=0 // pred_check_branch
    %18 = sbr.rel (0) target = $region13
  $region12: #{_lambda_.9} parent=0 // pred_region
    _
  $region13: #{_lambda_.9} parent=0 // pred_fallthru
    _
  // Predicated region
  $region14: #{_lambda_.9} parent=0 // pred_check
    _
  $region15: #{_lambda_.9} parent=0 // pred_check_branch
    %20 = sbr.rel (0) target = $region17
  $region16: #{_lambda_.9} parent=0 // pred_region
    _
  $region17: #{_lambda_.9} parent=0 // pred_fallthru
    _
  %v21 = vld [vmem:[%s0] sm:$0xff]
  %v22 = vld [vmem:[%s0 + $0x8] sm:$0xff]
  %v23 = vld [vmem:[%s0 + $0x10] sm:$0xff]
  %v24 = vld [vmem:[%s0 + $0x18] sm:$0xff]
  %v25 = vld [vmem:[%s1] sm:$0xf]
  %v26 = vld [vmem:[%s1 + $0x4] sm:$0xf]
  %v27 = vld [vmem:[%s1 + $0x8] sm:$0xf]
  %v28 = vld [vmem:[%s1 + $0xc] sm:$0xf]
  %v29 = vld [vmem:[%s1 + $0x10] sm:$0xf]
  %v30 = vld [vmem:[%s1 + $0x14] sm:$0xf]
  %v31 = vld [vmem:[%s1 + $0x18] sm:$0xf]
  %v32 = vld [vmem:[%s1 + $0x1c] sm:$0xf]
  %v33 = vld [vmem:[%s1 + $0x20] sm:$0xf]
  %v34 = vld [vmem:[%s1 + $0x24] sm:$0xf]
  %v35 = vld [vmem:[%s1 + $0x28] sm:$0xf]
  %v36 = vld [vmem:[%s1 + $0x2c] sm:$0xf]
  %v37 = vld [vmem:[%s1 + $0x30] sm:$0xf]
  %v38 = vld [vmem:[%s1 + $0x34] sm:$0xf]
  %v39 = vld [vmem:[%s1 + $0x38] sm:$0xf]
  %v40 = vld [vmem:[%s1 + $0x3c] sm:$0xf]
  %v41 = vld [vmem:[%s1 + $0x40] sm:$0xf]
  %v42 = vld [vmem:[%s1 + $0x44] sm:$0xf]
  %v43 = vld [vmem:[%s1 + $0x48] sm:$0xf]
  %v44 = vld [vmem:[%s1 + $0x4c] sm:$0xf]
  %v45 = vld [vmem:[%s1 + $0x50] sm:$0xf]
  %v46 = vld [vmem:[%s1 + $0x54] sm:$0xf]
  %v47 = vld [vmem:[%s1 + $0x58] sm:$0xf]
  %v48 = vld [vmem:[%s1 + $0x5c] sm:$0xf]
  %v49 = vld [vmem:[%s1 + $0x60] sm:$0xf]
  %v50 = vld [vmem:[%s1 + $0x64] sm:$0xf]
  %v51 = vld [vmem:[%s1 + $0x68] sm:$0xf]
  %v52 = vld [vmem:[%s1 + $0x6c] sm:$0xf]
  %v53 = vld [vmem:[%s1 + $0x70] sm:$0xf]
  %v54 = vld [vmem:[%s1 + $0x74] sm:$0xf]
  %v55 = vld [vmem:[%s1 + $0x78] sm:$0xf]
  %v56 = vld [vmem:[%s1 + $0x7c] sm:$0xf]
  %v57 = vld [vmem:[%s1 + $0x80] sm:$0xf]
  %v58 = vld [vmem:[%s1 + $0x84] sm:$0xf]
  %v59 = vld [vmem:[%s1 + $0x88] sm:$0xf]
  %v60 = vld [vmem:[%s1 + $0x8c] sm:$0xf]
  %v61 = vld [vmem:[%s1 + $0x90] sm:$0xf]
  %v62 = vld [vmem:[%s1 + $0x94] sm:$0xf]
  %v63 = vld [vmem:[%s1 + $0x98] sm:$0xf]
  %v64 = vld [vmem:[%s1 + $0x9c] sm:$0xf]
  %v65 = vld [vmem:[%s1 + $0xa0] sm:$0xf]
  %v66 = vld [vmem:[%s1 + $0xa4] sm:$0xf]
  %v67 = vld [vmem:[%s1 + $0xa8] sm:$0xf]
  %v68 = vld [vmem:[%s1 + $0xac] sm:$0xf]
  %v69 = vld [vmem:[%s1 + $0xb0] sm:$0xf]
  %v70 = vld [vmem:[%s1 + $0xb4] sm:$0xf]
  %v71 = vld [vmem:[%s1 + $0xb8] sm:$0xf]
  %v72 = vld [vmem:[%s1 + $0xbc] sm:$0xf]
  %v73 = vld [vmem:[%s1 + $0xc0] sm:$0xf]
  %v74 = vld [vmem:[%s1 + $0xc4] sm:$0xf]
  %v75 = vld [vmem:[%s1 + $0xc8] sm:$0xf]
  %v76 = vld [vmem:[%s1 + $0xcc] sm:$0xf]
  %v77 = vld [vmem:[%s1 + $0xd0] sm:$0xf]
  %v78 = vld [vmem:[%s1 + $0xd4] sm:$0xf]
  %v79 = vld [vmem:[%s1 + $0xd8] sm:$0xf]
  %v80 = vld [vmem:[%s1 + $0xdc] sm:$0xf]
  %v81 = vld [vmem:[%s1 + $0xe0] sm:$0xf]
  %v82 = vld [vmem:[%s1 + $0xe4] sm:$0xf]
  %v83 = vld [vmem:[%s1 + $0xe8] sm:$0xf]
  %v84 = vld [vmem:[%s1 + $0xec] sm:$0xf]
  %v85 = vld [vmem:[%s1 + $0xf0] sm:$0xf]
  %v86 = vld [vmem:[%s1 + $0xf4] sm:$0xf]
  %v87 = vld [vmem:[%s1 + $0xf8] sm:$0xf]
  %v88 = vld [vmem:[%s1 + $0xfc] sm:$0xf]
  %v89 = vld [vmem:[%s1 + $0x100] sm:$0xf]
  %v90 = vld [vmem:[%s1 + $0x104] sm:$0xf]
  %v91 = vld [vmem:[%s1 + $0x108] sm:$0xf]
  %v92 = vld [vmem:[%s1 + $0x10c] sm:$0xf]
  %v93 = vld [vmem:[%s1 + $0x110] sm:$0xf]
  %v94 = vld [vmem:[%s1 + $0x114] sm:$0xf]
  %v95 = vld [vmem:[%s1 + $0x118] sm:$0xf]
  %v96 = vld [vmem:[%s1 + $0x11c] sm:$0xf]
  %v97 = vld [vmem:[%s1 + $0x120] sm:$0xf]
  %v98 = vld [vmem:[%s1 + $0x124] sm:$0xf]
  %v99 = vld [vmem:[%s1 + $0x128] sm:$0xf]
  %v100 = vld [vmem:[%s1 + $0x12c] sm:$0xf]
  %v101 = vld [vmem:[%s1 + $0x130] sm:$0xf]
  %v102 = vld [vmem:[%s1 + $0x134] sm:$0xf]
  %v103 = vld [vmem:[%s1 + $0x138] sm:$0xf]
  %v104 = vld [vmem:[%s1 + $0x13c] sm:$0xf]
  %v105 = vld [vmem:[%s1 + $0x140] sm:$0xf]
  %v106 = vld [vmem:[%s1 + $0x144] sm:$0xf]
  %v107 = vld [vmem:[%s1 + $0x148] sm:$0xf]
  %v108 = vld [vmem:[%s1 + $0x14c] sm:$0xf]
  %v109 = vld [vmem:[%s1 + $0x150] sm:$0xf]
  %v110 = vld [vmem:[%s1 + $0x154] sm:$0xf]
  %v111 = vld [vmem:[%s1 + $0x158] sm:$0xf]
  %v112 = vld [vmem:[%s1 + $0x15c] sm:$0xf]
  %v113 = vld [vmem:[%s1 + $0x160] sm:$0xf]
  %v114 = vld [vmem:[%s1 + $0x164] sm:$0xf]
  %v115 = vld [vmem:[%s1 + $0x168] sm:$0xf]
  %v116 = vld [vmem:[%s1 + $0x16c] sm:$0xf]
  %v117 = vld [vmem:[%s1 + $0x170] sm:$0xf]
  %v118 = vld [vmem:[%s1 + $0x174] sm:$0xf]
  %v119 = vld [vmem:[%s1 + $0x178] sm:$0xf]
  %v120 = vld [vmem:[%s1 + $0x17c] sm:$0xf]
  %v121 = vld [vmem:[%s1 + $0x180] sm:$0xf]
  %v122 = vld [vmem:[%s1 + $0x184] sm:$0xf]
  %v123 = vld [vmem:[%s1 + $0x188] sm:$0xf]
  %v124 = vld [vmem:[%s1 + $0x18c] sm:$0xf]
  %v125 = vld [vmem:[%s1 + $0x190] sm:$0xf]
  %v126 = vld [vmem:[%s1 + $0x194] sm:$0xf]
  %v127 = vld [vmem:[%s1 + $0x198] sm:$0xf]
  %v128 = vld [vmem:[%s1 + $0x19c] sm:$0xf]
  %v129 = vld [vmem:[%s1 + $0x1a0] sm:$0xf]
  %v130 = vld [vmem:[%s1 + $0x1a4] sm:$0xf]
  %v131 = vld [vmem:[%s1 + $0x1a8] sm:$0xf]
  %v132 = vld [vmem:[%s1 + $0x1ac] sm:$0xf]
  %v133 = vld [vmem:[%s1 + $0x1b0] sm:$0xf]
  %v134 = vld [vmem:[%s1 + $0x1b4] sm:$0xf]
  %v135 = vld [vmem:[%s1 + $0x1b8] sm:$0xf]
  %v136 = vld [vmem:[%s1 + $0x1bc] sm:$0xf]
  %v137 = vld [vmem:[%s1 + $0x1c0] sm:$0xf]
  %v138 = vld [vmem:[%s1 + $0x1c4] sm:$0xf]
  %v139 = vld [vmem:[%s1 + $0x1c8] sm:$0xf]
  %v140 = vld [vmem:[%s1 + $0x1cc] sm:$0xf]
  %v141 = vld [vmem:[%s1 + $0x1d0] sm:$0xf]
  %v142 = vld [vmem:[%s1 + $0x1d4] sm:$0xf]
  %v143 = vld [vmem:[%s1 + $0x1d8] sm:$0xf]
  %v144 = vld [vmem:[%s1 + $0x1dc] sm:$0xf]
  %v145 = vld [vmem:[%s1 + $0x1e0] sm:$0xf]
  %v146 = vld [vmem:[%s1 + $0x1e4] sm:$0xf]
  %v147 = vld [vmem:[%s1 + $0x1e8] sm:$0xf]
  %v148 = vld [vmem:[%s1 + $0x1ec] sm:$0xf]
  %v149 = vld [vmem:[%s1 + $0x1f0] sm:$0xf]
  %v150 = vld [vmem:[%s1 + $0x1f4] sm:$0xf]
  %v151 = vld [vmem:[%s1 + $0x1f8] sm:$0xf]
  %v152 = vld [vmem:[%s1 + $0x1fc] sm:$0xf]
  %v157 = vunpack.c.l.b16 %v21
  %v158 = vunpack.c.h.b16 %v21
  %v159 = vunpack.c.l.b16 %v22
  %v160 = vunpack.c.h.b16 %v22
  %v161 = vunpack.c.l.b16 %v23
  %v162 = vunpack.c.h.b16 %v23
  %v163 = vunpack.c.l.b16 %v24
  %v164 = vunpack.c.h.b16 %v24
  %v165 = vpack.c.b16 %v157, %v157
  %v166 = vpack.c.b16 %v158, %v158
  %v167 = vpack.c.b16 %v159, %v159
  %v168 = vpack.c.b16 %v160, %v160
  %v169 = vpack.c.b16 %v161, %v161
  %v170 = vpack.c.b16 %v162, %v162
  %v171 = vpack.c.b16 %v163, %v163
  %v172 = vpack.c.b16 %v164, %v164
  %v309 = vunpack.c.l.b16 %v25
  %v310 = vunpack.c.l.b16 %v26
  %v311 = vunpack.c.l.b16 %v27
  %v312 = vunpack.c.l.b16 %v28
  %v313 = vunpack.c.l.b16 %v29
  %v314 = vunpack.c.l.b16 %v30
  %v315 = vunpack.c.l.b16 %v31
  %v316 = vunpack.c.l.b16 %v32
  %v317 = vunpack.c.l.b16 %v33
  %v318 = vunpack.c.l.b16 %v34
  %v319 = vunpack.c.l.b16 %v35
  %v320 = vunpack.c.l.b16 %v36
  %v321 = vunpack.c.l.b16 %v37
  %v322 = vunpack.c.l.b16 %v38
  %v323 = vunpack.c.l.b16 %v39
  %v324 = vunpack.c.l.b16 %v40
  %v325 = vunpack.c.l.b16 %v41
  %v326 = vunpack.c.l.b16 %v42
  %v327 = vunpack.c.l.b16 %v43
  %v328 = vunpack.c.l.b16 %v44
  %v329 = vunpack.c.l.b16 %v45
  %v330 = vunpack.c.l.b16 %v46
  %v331 = vunpack.c.l.b16 %v47
  %v332 = vunpack.c.l.b16 %v48
  %v333 = vunpack.c.l.b16 %v49
  %v334 = vunpack.c.l.b16 %v50
  %v335 = vunpack.c.l.b16 %v51
  %v336 = vunpack.c.l.b16 %v52
  %v337 = vunpack.c.l.b16 %v53
  %v338 = vunpack.c.l.b16 %v54
  %v339 = vunpack.c.l.b16 %v55
  %v340 = vunpack.c.l.b16 %v56
  %v341 = vunpack.c.l.b16 %v57
  %v342 = vunpack.c.l.b16 %v58
  %v343 = vunpack.c.l.b16 %v59
  %v344 = vunpack.c.l.b16 %v60
  %v345 = vunpack.c.l.b16 %v61
  %v346 = vunpack.c.l.b16 %v62
  %v347 = vunpack.c.l.b16 %v63
  %v348 = vunpack.c.l.b16 %v64
  %v349 = vunpack.c.l.b16 %v65
  %v350 = vunpack.c.l.b16 %v66
  %v351 = vunpack.c.l.b16 %v67
  %v352 = vunpack.c.l.b16 %v68
  %v353 = vunpack.c.l.b16 %v69
  %v354 = vunpack.c.l.b16 %v70
  %v355 = vunpack.c.l.b16 %v71
  %v356 = vunpack.c.l.b16 %v72
  %v357 = vunpack.c.l.b16 %v73
  %v358 = vunpack.c.l.b16 %v74
  %v359 = vunpack.c.l.b16 %v75
  %v360 = vunpack.c.l.b16 %v76
  %v361 = vunpack.c.l.b16 %v77
  %v362 = vunpack.c.l.b16 %v78
  %v363 = vunpack.c.l.b16 %v79
  %v364 = vunpack.c.l.b16 %v80
  %v365 = vunpack.c.l.b16 %v81
  %v366 = vunpack.c.l.b16 %v82
  %v367 = vunpack.c.l.b16 %v83
  %v368 = vunpack.c.l.b16 %v84
  %v369 = vunpack.c.l.b16 %v85
  %v370 = vunpack.c.l.b16 %v86
  %v371 = vunpack.c.l.b16 %v87
  %v372 = vunpack.c.l.b16 %v88
  %v373 = vunpack.c.l.b16 %v89
  %v374 = vunpack.c.l.b16 %v90
  %v375 = vunpack.c.l.b16 %v91
  %v376 = vunpack.c.l.b16 %v92
  %v377 = vunpack.c.l.b16 %v93
  %v378 = vunpack.c.l.b16 %v94
  %v379 = vunpack.c.l.b16 %v95
  %v380 = vunpack.c.l.b16 %v96
  %v381 = vunpack.c.l.b16 %v97
  %v382 = vunpack.c.l.b16 %v98
  %v383 = vunpack.c.l.b16 %v99
  %v384 = vunpack.c.l.b16 %v100
  %v385 = vunpack.c.l.b16 %v101
  %v386 = vunpack.c.l.b16 %v102
  %v387 = vunpack.c.l.b16 %v103
  %v388 = vunpack.c.l.b16 %v104
  %v389 = vunpack.c.l.b16 %v105
  %v390 = vunpack.c.l.b16 %v106
  %v391 = vunpack.c.l.b16 %v107
  %v392 = vunpack.c.l.b16 %v108
  %v393 = vunpack.c.l.b16 %v109
  %v394 = vunpack.c.l.b16 %v110
  %v395 = vunpack.c.l.b16 %v111
  %v396 = vunpack.c.l.b16 %v112
  %v397 = vunpack.c.l.b16 %v113
  %v398 = vunpack.c.l.b16 %v114
  %v399 = vunpack.c.l.b16 %v115
  %v400 = vunpack.c.l.b16 %v116
  %v401 = vunpack.c.l.b16 %v117
  %v402 = vunpack.c.l.b16 %v118
  %v403 = vunpack.c.l.b16 %v119
  %v404 = vunpack.c.l.b16 %v120
  %v405 = vunpack.c.l.b16 %v121
  %v406 = vunpack.c.l.b16 %v122
  %v407 = vunpack.c.l.b16 %v123
  %v408 = vunpack.c.l.b16 %v124
  %v409 = vunpack.c.l.b16 %v125
  %v410 = vunpack.c.l.b16 %v126
  %v411 = vunpack.c.l.b16 %v127
  %v412 = vunpack.c.l.b16 %v128
  %v413 = vunpack.c.l.b16 %v129
  %v414 = vunpack.c.l.b16 %v130
  %v415 = vunpack.c.l.b16 %v131
  %v416 = vunpack.c.l.b16 %v132
  %v417 = vunpack.c.l.b16 %v133
  %v418 = vunpack.c.l.b16 %v134
  %v419 = vunpack.c.l.b16 %v135
  %v420 = vunpack.c.l.b16 %v136
  %v421 = vunpack.c.l.b16 %v137
  %v422 = vunpack.c.l.b16 %v138
  %v423 = vunpack.c.l.b16 %v139
  %v424 = vunpack.c.l.b16 %v140
  %v425 = vunpack.c.l.b16 %v141
  %v426 = vunpack.c.l.b16 %v142
  %v427 = vunpack.c.l.b16 %v143
  %v428 = vunpack.c.l.b16 %v144
  %v429 = vunpack.c.l.b16 %v145
  %v430 = vunpack.c.l.b16 %v146
  %v431 = vunpack.c.l.b16 %v147
  %v432 = vunpack.c.l.b16 %v148
  %v433 = vunpack.c.l.b16 %v149
  %v434 = vunpack.c.l.b16 %v150
  %v435 = vunpack.c.l.b16 %v151
  %v436 = vunpack.c.l.b16 %v152
  %v437 = vpack.c.b16 %v310, %v309
  %v438 = vpack.c.b16 %v312, %v311
  %v439 = vpack.c.b16 %v314, %v313
  %v440 = vpack.c.b16 %v316, %v315
  %v441 = vpack.c.b16 %v318, %v317
  %v442 = vpack.c.b16 %v320, %v319
  %v443 = vpack.c.b16 %v322, %v321
  %v444 = vpack.c.b16 %v324, %v323
  %v445 = vpack.c.b16 %v326, %v325
  %v446 = vpack.c.b16 %v328, %v327
  %v447 = vpack.c.b16 %v330, %v329
  %v448 = vpack.c.b16 %v332, %v331
  %v449 = vpack.c.b16 %v334, %v333
  %v450 = vpack.c.b16 %v336, %v335
  %v451 = vpack.c.b16 %v338, %v337
  %v452 = vpack.c.b16 %v340, %v339
  %v453 = vpack.c.b16 %v342, %v341
  %v454 = vpack.c.b16 %v344, %v343
  %v455 = vpack.c.b16 %v346, %v345
  %v456 = vpack.c.b16 %v348, %v347
  %v457 = vpack.c.b16 %v350, %v349
  %v458 = vpack.c.b16 %v352, %v351
  %v459 = vpack.c.b16 %v354, %v353
  %v460 = vpack.c.b16 %v356, %v355
  %v461 = vpack.c.b16 %v358, %v357
  %v462 = vpack.c.b16 %v360, %v359
  %v463 = vpack.c.b16 %v362, %v361
  %v464 = vpack.c.b16 %v364, %v363
  %v465 = vpack.c.b16 %v366, %v365
  %v466 = vpack.c.b16 %v368, %v367
  %v467 = vpack.c.b16 %v370, %v369
  %v468 = vpack.c.b16 %v372, %v371
  %v469 = vpack.c.b16 %v374, %v373
  %v470 = vpack.c.b16 %v376, %v375
  %v471 = vpack.c.b16 %v378, %v377
  %v472 = vpack.c.b16 %v380, %v379
  %v473 = vpack.c.b16 %v382, %v381
  %v474 = vpack.c.b16 %v384, %v383
  %v475 = vpack.c.b16 %v386, %v385
  %v476 = vpack.c.b16 %v388, %v387
  %v477 = vpack.c.b16 %v390, %v389
  %v478 = vpack.c.b16 %v392, %v391
  %v479 = vpack.c.b16 %v394, %v393
  %v480 = vpack.c.b16 %v396, %v395
  %v481 = vpack.c.b16 %v398, %v397
  %v482 = vpack.c.b16 %v400, %v399
  %v483 = vpack.c.b16 %v402, %v401
  %v484 = vpack.c.b16 %v404, %v403
  %v485 = vpack.c.b16 %v406, %v405
  %v486 = vpack.c.b16 %v408, %v407
  %v487 = vpack.c.b16 %v410, %v409
  %v488 = vpack.c.b16 %v412, %v411
  %v489 = vpack.c.b16 %v414, %v413
  %v490 = vpack.c.b16 %v416, %v415
  %v491 = vpack.c.b16 %v418, %v417
  %v492 = vpack.c.b16 %v420, %v419
  %v493 = vpack.c.b16 %v422, %v421
  %v494 = vpack.c.b16 %v424, %v423
  %v495 = vpack.c.b16 %v426, %v425
  %v496 = vpack.c.b16 %v428, %v427
  %v497 = vpack.c.b16 %v430, %v429
  %v498 = vpack.c.b16 %v432, %v431
  %v499 = vpack.c.b16 %v434, %v433
  %v500 = vpack.c.b16 %v436, %v435
  %565 = vmatpush.bf16.msra.mxu0 %v444
  %566 = vmatpush.bf16.msra.mxu0 %v443
  %567 = vmatpush.bf16.msra.mxu0 %v442
  %568 = vmatpush.bf16.msra.mxu0 %v441
  %569 = vmatpush.bf16.msra.mxu0 %v440
  %570 = vmatpush.bf16.msra.mxu0 %v439
  %571 = vmatpush.bf16.msra.mxu0 %v438
  %572 = vmatpush.bf16.msra.mxu0 %v437
  %573 = vmatmul.bf16.gmra.mxu0 %v165
  %v574 = vpop.f32.mrf.mxu0
  %v575 = vadd.f32 0.0, %v574
  %v576 = vpop.f32.mrf.mxu0
  %577 = vdwg.mxu0
  %578 = vmatpush.bf16.msra.mxu0 %v452
  %579 = vmatpush.bf16.msra.mxu0 %v451
  %580 = vmatpush.bf16.msra.mxu0 %v450
  %581 = vmatpush.bf16.msra.mxu0 %v449
  %582 = vmatpush.bf16.msra.mxu0 %v448
  %583 = vmatpush.bf16.msra.mxu0 %v447
  %584 = vmatpush.bf16.msra.mxu0 %v446
  %585 = vmatpush.bf16.msra.mxu0 %v445
  %586 = vmatmul.bf16.gmra.mxu0 %v166
  %v587 = vpop.f32.mrf.mxu0
  %v588 = vadd.f32 %v575, %v587
  %v589 = vpop.f32.mrf.mxu0
  %590 = vdwg.mxu0
  %591 = vmatpush.bf16.msra.mxu0 %v460
  %592 = vmatpush.bf16.msra.mxu0 %v459
  %593 = vmatpush.bf16.msra.mxu0 %v458
  %594 = vmatpush.bf16.msra.mxu0 %v457
  %595 = vmatpush.bf16.msra.mxu0 %v456
  %596 = vmatpush.bf16.msra.mxu0 %v455
  %597 = vmatpush.bf16.msra.mxu0 %v454
  %598 = vmatpush.bf16.msra.mxu0 %v453
  %599 = vmatmul.bf16.gmra.mxu0 %v167
  %v600 = vpop.f32.mrf.mxu0
  %v601 = vadd.f32 %v588, %v600
  %v602 = vpop.f32.mrf.mxu0
  %603 = vdwg.mxu0
  %604 = vmatpush.bf16.msra.mxu0 %v468
  %605 = vmatpush.bf16.msra.mxu0 %v467
  %606 = vmatpush.bf16.msra.mxu0 %v466
  %607 = vmatpush.bf16.msra.mxu0 %v465
  %608 = vmatpush.bf16.msra.mxu0 %v464
  %609 = vmatpush.bf16.msra.mxu0 %v463
  %610 = vmatpush.bf16.msra.mxu0 %v462
  %611 = vmatpush.bf16.msra.mxu0 %v461
  %612 = vmatmul.bf16.gmra.mxu0 %v168
  %v613 = vpop.f32.mrf.mxu0
  %v614 = vadd.f32 %v601, %v613
  %v615 = vpop.f32.mrf.mxu0
  %616 = vdwg.mxu0
  %617 = vmatpush.bf16.msra.mxu0 %v476
  %618 = vmatpush.bf16.msra.mxu0 %v475
  %619 = vmatpush.bf16.msra.mxu0 %v474
  %620 = vmatpush.bf16.msra.mxu0 %v473
  %621 = vmatpush.bf16.msra.mxu0 %v472
  %622 = vmatpush.bf16.msra.mxu0 %v471
  %623 = vmatpush.bf16.msra.mxu0 %v470
  %624 = vmatpush.bf16.msra.mxu0 %v469
  %625 = vmatmul.bf16.gmra.mxu0 %v169
  %v626 = vpop.f32.mrf.mxu0
  %v627 = vadd.f32 %v614, %v626
  %v628 = vpop.f32.mrf.mxu0
  %629 = vdwg.mxu0
  %630 = vmatpush.bf16.msra.mxu0 %v484
  %631 = vmatpush.bf16.msra.mxu0 %v483
  %632 = vmatpush.bf16.msra.mxu0 %v482
  %633 = vmatpush.bf16.msra.mxu0 %v481
  %634 = vmatpush.bf16.msra.mxu0 %v480
  %635 = vmatpush.bf16.msra.mxu0 %v479
  %636 = vmatpush.bf16.msra.mxu0 %v478
  %637 = vmatpush.bf16.msra.mxu0 %v477
  %638 = vmatmul.bf16.gmra.mxu0 %v170
  %v639 = vpop.f32.mrf.mxu0
  %v640 = vadd.f32 %v627, %v639
  %v641 = vpop.f32.mrf.mxu0
  %642 = vdwg.mxu0
  %643 = vmatpush.bf16.msra.mxu0 %v492
  %644 = vmatpush.bf16.msra.mxu0 %v491
  %645 = vmatpush.bf16.msra.mxu0 %v490
  %646 = vmatpush.bf16.msra.mxu0 %v489
  %647 = vmatpush.bf16.msra.mxu0 %v488
  %648 = vmatpush.bf16.msra.mxu0 %v487
  %649 = vmatpush.bf16.msra.mxu0 %v486
  %650 = vmatpush.bf16.msra.mxu0 %v485
  %651 = vmatmul.bf16.gmra.mxu0 %v171
  %v652 = vpop.f32.mrf.mxu0
  %v653 = vadd.f32 %v640, %v652
  %v654 = vpop.f32.mrf.mxu0
  %655 = vdwg.mxu0
  %656 = vmatpush.bf16.msra.mxu0 %v500
  %657 = vmatpush.bf16.msra.mxu0 %v499
  %658 = vmatpush.bf16.msra.mxu0 %v498
  %659 = vmatpush.bf16.msra.mxu0 %v497
  %660 = vmatpush.bf16.msra.mxu0 %v496
  %661 = vmatpush.bf16.msra.mxu0 %v495
  %662 = vmatpush.bf16.msra.mxu0 %v494
  %663 = vmatpush.bf16.msra.mxu0 %v493
  %664 = vmatmul.bf16.gmra.mxu0 %v172
  %v665 = vpop.f32.mrf.mxu0
  %v666 = vadd.f32 %v653, %v665
  %v667 = vpop.f32.mrf.mxu0
  %668 = vdwg.mxu0
  %v669 = vld [vmem:[#allocation2] sm:$0x1]
  %v671 = vperm.slane %v669, 0
  %v673 = vmul.f32 %v666, %v671
  %v674 = vld [vmem:[#allocation3] sm:$0x1]
  %v676 = vperm.slane %v674, 0
  %v678 = vadd.f32 %v673, %v676
  %vm679 = vcmask 7168
  %680 = vst.msk [vmem:[%s4] sm:$0xff] %vm679, %v678
  // Predicated region
  $region18: #{_lambda_.9} parent=0 // pred_check
    _
  $region19: #{_lambda_.9} parent=0 // pred_check_branch
    %682 = sbr.rel (0) target = $region21
  $region20: #{_lambda_.9} parent=0 // pred_region
    _
  $region21: #{_lambda_.9} parent=0 // pred_fallthru
    _
  // Predicated region
  $region22: #{_lambda_.9} parent=0 // pred_check
    _
  $region23: #{_lambda_.9} parent=0 // pred_check_branch
    %684 = sbr.rel (0) target = $region25
  $region24: #{_lambda_.9} parent=0 // pred_region
    _
  $region25: #{_lambda_.9} parent=0 // pred_fallthru
    _

</llo_original>
